<compile_context>
chip_gen: v7x
topology: tpu7x:2x2x1
jax: 0.10.0
libtpu: 0.0.40
codegen_flags: <defaults>
</compile_context>

<pallas_src>
import numpy as np
import jax
import jax.numpy as jnp
from jax import lax
from jax.experimental import pallas as pl
from jax.experimental.pallas import tpu as pltpu

ANGLE_BINS = 16
RADIUS_BINS = 8
GROUPS = 4


# ----------------------------------------------------------------------------
# Static nearest-neighbour polar <-> cartesian index rules (trace-time, numpy)
# ----------------------------------------------------------------------------
def _cart_to_polar_indices(h, w):
    cy, cx = (h - 1) / 2.0, (w - 1) / 2.0
    max_r = min(h, w) / 2.0
    theta = 2.0 * np.pi * np.arange(ANGLE_BINS) / ANGLE_BINS
    rad = (np.arange(RADIUS_BINS) + 0.5) / RADIUS_BINS * max_r
    yy = cy + rad[None, :] * np.sin(theta)[:, None]
    xx = cx + rad[None, :] * np.cos(theta)[:, None]
    yi = np.clip(np.round(yy).astype(np.int32), 0, h - 1)
    xi = np.clip(np.round(xx).astype(np.int32), 0, w - 1)
    return yi, xi                                   # (ANGLE_BINS, RADIUS_BINS)


def _polar_to_cart_indices(h, w):
    cy, cx = (h - 1) / 2.0, (w - 1) / 2.0
    max_r = min(h, w) / 2.0
    yy, xx = np.meshgrid(np.arange(h, dtype=np.float64),
                         np.arange(w, dtype=np.float64), indexing="ij")
    dy, dx = yy - cy, xx - cx
    rad = np.sqrt(dy * dy + dx * dx)
    theta = np.mod(np.arctan2(dy, dx), 2.0 * np.pi)
    ai = np.mod(np.round(theta / (2.0 * np.pi) * ANGLE_BINS).astype(np.int32),
                ANGLE_BINS)
    ri = np.clip(np.round(rad / max_r * RADIUS_BINS - 0.5).astype(np.int32),
                 0, RADIUS_BINS - 1)
    return ai, ri                                   # (H, W)


# ----------------------------------------------------------------------------
# Static one-hot gather matrices (trace-time constants, stored bf16 — exact 0/1)
# ----------------------------------------------------------------------------
def _build_tap_matrices(h, w):
    """Nine (H*W, A*R) one-hot matrices: cart->polar sampling shifted by each 3x3
    conv tap; out-of-range taps are all-zero columns (== the conv's zero pad)."""
    yi, xi = _cart_to_polar_indices(h, w)
    src = yi * w + xi                               # (A, R) flat cartesian index
    ar = ANGLE_BINS * RADIUS_BINS
    taps = np.zeros((9, h * w, ar), np.float32)
    for kh in range(3):
        for kw in range(3):
            t = kh * 3 + kw
            for a in range(ANGLE_BINS):
                for r in range(RADIUS_BINS):
                    aa, rr = a + kh - 1, r + kw - 1
                    if 0 <= aa < ANGLE_BINS and 0 <= rr < RADIUS_BINS:
                        taps[t, src[aa, rr], a * RADIUS_BINS + r] = 1.0
    return jnp.asarray(taps, dtype=jnp.bfloat16)    # (9, H*W, A*R)


def _build_p2c_matrix(h, w):
    """One-hot (A*R, H*W): polar->cartesian nearest-neighbour resampling."""
    ai, ri = _polar_to_cart_indices(h, w)
    pidx = (ai * RADIUS_BINS + ri).reshape(-1)      # (H*W,)
    m = np.zeros((ANGLE_BINS * RADIUS_BINS, h * w), np.float32)
    m[pidx, np.arange(h * w)] = 1.0
    return jnp.asarray(m, dtype=jnp.bfloat16)


# ----------------------------------------------------------------------------
# Weight folding (W1 folded into the grouped conv; done once per call in wrapper)
# ----------------------------------------------------------------------------
def _fold_weights(params, channels):
    """Grouped 3x3 weight (C, C//g, 3, 3) + first 1x1 conv (c4, C) folded into
    wfold (c4, 9, C) [columns ordered (t=kh*3+kw, ci)] and bias (c4,)."""
    c4 = channels // 4
    cg = channels // GROUPS
    w_polar = params["w_polar"].astype(jnp.float32)
    w_dense = jnp.zeros((channels, channels, 3, 3), jnp.float32)   # (co, ci, kh, kw)
    for g in range(GROUPS):
        sl = slice(g * cg, (g + 1) * cg)
        w_dense = w_dense.at[sl, sl].set(w_polar[sl])
    # wfold[d, kh, kw, ci] = sum_co w1[d, co] * w_dense[co, ci, kh, kw]
    wfold = jnp.einsum("do,oihw->dhwi",
                       params["w1"].astype(jnp.float32), w_dense)
    wfold = wfold.reshape(c4, 9, channels)
    bfold = params["w1"] @ params["b_polar"] + params["b1"]        # (c4,)
    return wfold, bfold.astype(jnp.float32)


def _pick_batch_tile(b, c):
    """Images per block: fill MXU rows, keep >=2 grid steps when B>=2 (v7x has
    two TensorCores), and keep the x/out block sublane-aligned (bt*C % 8 == 0)."""
    divs = [d for d in range(1, b + 1) if b % d == 0]
    target = max(1, 128 // c)
    cand = [d for d in divs
            if d <= target and (b // d >= 2 or b < 2) and (d * c) % 8 == 0]
    if cand:
        return max(cand)
    return b                      # one block over the whole batch (always legal)


# ----------------------------------------------------------------------------
# Fused Pallas kernel (one grid step == `bt` images)
# ----------------------------------------------------------------------------
def _make_kernel(bt, channels, c4, hw, ar):
    btc = bt * channels
    n_taps = 9

    def kernel(x_ref, taps_ref, wbd_ref, p2c_ref, b1_ref, w2e_ref, b2_ref, e_ref,
               o_ref, xcol_ref):
        # x_ref    : (bt*C, HW)           images, channels-on-sublane / spatial-on-lane
        # taps_ref : (9, HW, AR) bf16     one-hot cart->polar gather per conv tap
        # wbd_ref  : (bt*c4, 9*bt*C)      W1-folded, image-block-diagonal conv weight
        # p2c_ref  : (AR, HW)    bf16     one-hot polar->cart gather
        # b1_ref   : (bt*c4, 1)           folded bias  (w1 @ b_polar + b1), tiled over bt
        # w2e_ref  : (bt, bt*c4)          second 1x1 conv, block-diagonal over images
        # b2_ref   : (bt, 1)              its bias
        # e_ref    : (bt*C, bt)           one-hot row-expansion (attention -> channels)
        # o_ref    : (bt*C, HW)
        # xcol_ref : VMEM scratch (9*bt*C, AR)  im2col columns
        x = x_ref[...]                                               # f32

        # 1. cartesian->polar sampling fused with the 9 conv-tap shifts: one MXU
        #    matmul per tap, batched over all bt images (M = bt*C rows).  The
        #    bf16 one-hot matrices are exact after the cast, so math stays f32.
        for t in range(n_taps):
            tap = taps_ref[t].astype(jnp.float32)                    # (HW, AR)
            xcol_ref[t * btc:(t + 1) * btc, :] = jnp.dot(
                x, tap, preferred_element_type=jnp.float32)

        # 2. grouped 3x3 conv with W1 folded in: ONE im2col matmul producing the
        #    pre-ReLU hidden activations in polar space, (bt*c4, AR); folded bias
        #    added on the VPU from a small VMEM column (no ones/K-pad block).
        conv = jnp.dot(wbd_ref[...], xcol_ref[...],
                       preferred_element_type=jnp.float32) + b1_ref[...]

        # 3. polar->cartesian resampling (one-hot matmul) + ReLU -> h1 (bt*c4, HW).
        h1 = jnp.maximum(
            jnp.dot(conv, p2c_ref[...].astype(jnp.float32),
                    preferred_element_type=jnp.float32), 0.0)

        # 4. second 1x1 conv (block-diag over images) -> sigmoid -> attention
        #    (bt, HW); expand back over channels with a tiny one-hot matmul (no
        #    sublane slicing / scalar broadcasts) and gate x.  Lane-dense store.
        att = jax.nn.sigmoid(
            jnp.dot(w2e_ref[...], h1, preferred_element_type=jnp.float32)
            + b2_ref[...])                                           # (bt, HW)
        gate = jnp.dot(e_ref[...], att,
                       preferred_element_type=jnp.float32)           # (bt*C, HW)
        o_ref[...] = (x * gate).astype(o_ref.dtype)

    return kernel


# ----------------------------------------------------------------------------
# Parameter construction (deterministic, mirrors the PyTorch module __init__)
# ----------------------------------------------------------------------------
def init_params(channels, key):
    c4 = channels // 4
    cg = channels // GROUPS
    ks = jax.random.split(key, 6)
    w_polar = jax.random.normal(ks[0], (channels, cg, 3, 3), jnp.float32) * 0.1
    b_polar = jax.random.normal(ks[1], (channels,), jnp.float32) * 0.05
    w1 = jax.random.normal(ks[2], (c4, channels), jnp.float32) * 0.1
    b1 = jax.random.normal(ks[3], (c4,), jnp.float32) * 0.05
    w2 = jax.random.normal(ks[4], (1, c4), jnp.float32) * 0.1
    b2 = jax.random.normal(ks[5], (1,), jnp.float32) * 0.05
    return dict(w_polar=w_polar, b_polar=b_polar, w1=w1, b1=b1, w2=w2, b2=b2)


# ----------------------------------------------------------------------------
# Forward pass (single fused pallas_call)
# ----------------------------------------------------------------------------
def polar_transform_attention(x_nchw, params):
    b, c, h, w = x_nchw.shape
    assert c % 4 == 0, "channels must be divisible by 4 (groups=4, channels//4 head)"
    c4 = c // 4
    hw = h * w
    ar = ANGLE_BINS * RADIUS_BINS
    bt = _pick_batch_tile(b, c)

    x2d = x_nchw.reshape(b * c, hw).astype(jnp.float32)          # (B*C, H*W)

    taps = _build_tap_matrices(h, w)                             # (9, HW, AR) bf16
    p2c = _build_p2c_matrix(h, w)                                # (AR, HW)    bf16
    wfold, bfold = _fold_weights(params, c)                      # (c4,9,C), (c4,)

    # Image-block-diagonal folded weights for a bt-image tile (tiny, built per call).
    eye = np.eye(bt, dtype=np.float32)
    wbd = jnp.einsum("bB,dtc->bdtBc", eye, wfold).reshape(bt * c4, 9 * bt * c)
    b1c = jnp.tile(bfold, bt).reshape(bt * c4, 1)
    w2e = jnp.einsum("bB,d->bBd", eye,
                     params["w2"][0].astype(jnp.float32)).reshape(bt, bt * c4)
    b2c = jnp.broadcast_to(params["b2"].reshape(1, 1).astype(jnp.float32), (bt, 1))
    exp = jnp.asarray(np.repeat(eye, c, axis=0))                 # (bt*C, bt)

    kernel = _make_kernel(bt, c, c4, hw, ar)

    # TODO(synk): for large H/W/C tile the HW (lane) axis of taps/p2c on a grid
    # axis, keep them bf16 / single-buffered, and set vmem_limit_bytes (v7x: 64 MiB
    # physical VMEM per TC and constants are duplicated per core).
    out = pl.pallas_call(
        kernel,
        out_shape=jax.ShapeDtypeStruct((b * c, hw), jnp.float32),
        grid=(b // bt,),
        in_specs=[
            pl.BlockSpec((bt * c, hw), lambda i: (i, 0)),             # x tile
            pl.BlockSpec((9, hw, ar), lambda i: (0, 0, 0)),           # tap gather mats
            pl.BlockSpec((bt * c4, 9 * bt * c), lambda i: (0, 0)),    # folded conv wts
            pl.BlockSpec((ar, hw), lambda i: (0, 0)),                 # polar->cart mat
            pl.BlockSpec((bt * c4, 1), lambda i: (0, 0)),             # folded bias
            pl.BlockSpec((bt, bt * c4), lambda i: (0, 0)),            # w2 (block-diag)
            pl.BlockSpec((bt, 1), lambda i: (0, 0)),                  # b2
            pl.BlockSpec((bt * c, bt), lambda i: (0, 0)),             # channel expand
        ],
        out_specs=pl.BlockSpec((bt * c, hw), lambda i: (i, 0)),
        scratch_shapes=[pltpu.VMEM((9 * bt * c, ar), jnp.float32)],   # im2col columns
        compiler_params=pltpu.CompilerParams(
            dimension_semantics=("parallel",)),
    )(x2d, taps, wbd, p2c, b1c, w2e, b2c, exp)

    return out.reshape(b, c, h, w)


# ----------------------------------------------------------------------------
# Pure-JAX reference (same nearest-neighbour polar mapping) for sanity checking
# ----------------------------------------------------------------------------
def reference(x_nchw, params):
    b, c, h, w = x_nchw.shape
    x = jnp.transpose(x_nchw, (0, 2, 3, 1)).astype(jnp.float32)  # NHWC
    yi, xi = _cart_to_polar_indices(h, w)
    polar = x[:, yi, xi, :]                                      # (B, A, R, C)
    polar_nchw = jnp.transpose(polar, (0, 3, 1, 2))
    pp = lax.conv_general_dilated(
        polar_nchw, params["w_polar"], (1, 1), "SAME",
        feature_group_count=GROUPS,
        dimension_numbers=("NCHW", "OIHW", "NCHW"),
    ) + params["b_polar"][None, :, None, None]
    pp = jnp.transpose(pp, (0, 2, 3, 1))
    ai, ri = _polar_to_cart_indices(h, w)
    pc = pp[:, ai, ri, :]                                        # (B, H, W, C)
    h1 = jnp.maximum(jnp.einsum("bhwc,dc->bhwd", pc, params["w1"]) + params["b1"], 0.0)
    att = jax.nn.sigmoid(jnp.einsum("bhwd,od->bhwo", h1, params["w2"]) + params["b2"])
    return jnp.transpose(x * att, (0, 3, 1, 2))                  # NCHW


# ----------------------------------------------------------------------------
if __name__ == "__main__":
    key = jax.random.PRNGKey(0)
    kx, kp = jax.random.split(key)

    batch, channels, height, width = 2, 8, 16, 16
    x = jax.random.normal(kx, (batch, channels, height, width), jnp.float32)
    params = init_params(channels, kp)

    fwd = jax.jit(polar_transform_attention)
    out = jax.block_until_ready(fwd(x, params))
    ref = jax.block_until_ready(reference(x, params))
    np.testing.assert_allclose(np.asarray(out), np.asarray(ref), rtol=1e-3, atol=1e-3)

    # Also exercise the batched-M path (batch_tile > 1) with B=4 -> bt=2, grid=(2,).
    x4 = jax.random.normal(jax.random.fold_in(kx, 1),
                           (4, channels, height, width), jnp.float32)
    out4 = jax.block_until_ready(fwd(x4, params))
    ref4 = jax.block_until_ready(reference(x4, params))
    np.testing.assert_allclose(np.asarray(out4), np.asarray(ref4), rtol=1e-3, atol=1e-3)

    print("KERNEL_OK")
</pallas_src>

<mosaic_0001>
module attributes {stable_mosaic.version = 11 : i64} {
  func.func @kernel(%arg0: i32, %arg1: memref<8x256xf32, #tpu.memory_space<vmem>>, %arg2: memref<9x256x128xbf16, #tpu.memory_space<vmem>>, %arg3: memref<2x72xf32, #tpu.memory_space<vmem>>, %arg4: memref<128x256xbf16, #tpu.memory_space<vmem>>, %arg5: memref<2x1xf32, #tpu.memory_space<vmem>>, %arg6: memref<1x2xf32, #tpu.memory_space<vmem>>, %arg7: memref<1x1xf32, #tpu.memory_space<vmem>>, %arg8: memref<8x1xf32, #tpu.memory_space<vmem>>, %arg9: memref<8x256xf32, #tpu.memory_space<vmem>>, %arg10: memref<72x128xf32, #tpu.memory_space<vmem>>) attributes {dimension_semantics = [#tpu.dimension_semantics<parallel>], iteration_bounds = array<i64: 2>, scalar_prefetch = 0 : i64, scratch_operands = 1 : i64, tpu.core_type = #tpu.core_type<tc>, window_params = [{transform_indices = @transform_0, window_bounds = array<i64: 8, 256>}, {pipeline_mode = #tpu.pipeline_mode<synchronous>, transform_indices = @transform_1, window_bounds = array<i64: 9, 256, 128>}, {pipeline_mode = #tpu.pipeline_mode<synchronous>, transform_indices = @transform_2, window_bounds = array<i64: 2, 72>}, {pipeline_mode = #tpu.pipeline_mode<synchronous>, transform_indices = @transform_3, window_bounds = array<i64: 128, 256>}, {pipeline_mode = #tpu.pipeline_mode<synchronous>, transform_indices = @transform_4, window_bounds = array<i64: 2, 1>}, {pipeline_mode = #tpu.pipeline_mode<synchronous>, transform_indices = @transform_5, window_bounds = array<i64: 1, 2>}, {pipeline_mode = #tpu.pipeline_mode<synchronous>, transform_indices = @transform_6, window_bounds = array<i64: 1, 1>}, {pipeline_mode = #tpu.pipeline_mode<synchronous>, transform_indices = @transform_7, window_bounds = array<i64: 8, 1>}, {transform_indices = @transform_8, window_bounds = array<i64: 8, 256>}]} {
    %c0 = arith.constant 0 : index
    %c0_0 = arith.constant 0 : index
    %0 = vector.load %arg1[%c0, %c0_0] : memref<8x256xf32, #tpu.memory_space<vmem>>, vector<8x256xf32>
    %c0_1 = arith.constant 0 : index
    %c0_2 = arith.constant 0 : index
    %c0_3 = arith.constant 0 : index
    %1 = vector.load %arg2[%c0_1, %c0_2, %c0_3] : memref<9x256x128xbf16, #tpu.memory_space<vmem>>, vector<1x256x128xbf16>
    %2 = vector.shape_cast %1 : vector<1x256x128xbf16> to vector<256x128xbf16>
    %3 = arith.extf %2 : vector<256x128xbf16> to vector<256x128xf32>
    %cst = arith.constant dense<0.000000e+00> : vector<8x128xf32>
    %4 = tpu.matmul %0, %3, %cst {dimension_numbers = #tpu.dot_dimension_numbers<[1], [0], [0], [1], [0, 0, 1, 1], [], []>} : vector<8x256xf32>, vector<256x128xf32>, vector<8x128xf32> -> vector<8x128xf32>
    %c0_4 = arith.constant 0 : index
    %c0_5 = arith.constant 0 : index
    %5 = vector.load %arg10[%c0_4, %c0_5] : memref<72x128xf32, #tpu.memory_space<vmem>>, vector<8x128xf32>
    tpu.vector_store %arg10[%c0_4, %c0_5], %4 {strides = array<i32>} : memref<72x128xf32, #tpu.memory_space<vmem>>, vector<8x128xf32>,
    %c1 = arith.constant 1 : index
    %c0_6 = arith.constant 0 : index
    %c0_7 = arith.constant 0 : index
    %6 = vector.load %arg2[%c1, %c0_6, %c0_7] : memref<9x256x128xbf16, #tpu.memory_space<vmem>>, vector<1x256x128xbf16>
    %7 = vector.shape_cast %6 : vector<1x256x128xbf16> to vector<256x128xbf16>
    %8 = arith.extf %7 : vector<256x128xbf16> to vector<256x128xf32>
    %cst_8 = arith.constant dense<0.000000e+00> : vector<8x128xf32>
    %9 = tpu.matmul %0, %8, %cst_8 {dimension_numbers = #tpu.dot_dimension_numbers<[1], [0], [0], [1], [0, 0, 1, 1], [], []>} : vector<8x256xf32>, vector<256x128xf32>, vector<8x128xf32> -> vector<8x128xf32>
    %c8 = arith.constant 8 : index
    %c0_9 = arith.constant 0 : index
    %10 = vector.load %arg10[%c8, %c0_9] : memref<72x128xf32, #tpu.memory_space<vmem>>, vector<8x128xf32>
    tpu.vector_store %arg10[%c8, %c0_9], %9 {strides = array<i32>} : memref<72x128xf32, #tpu.memory_space<vmem>>, vector<8x128xf32>,
    %c2 = arith.constant 2 : index
    %c0_10 = arith.constant 0 : index
    %c0_11 = arith.constant 0 : index
    %11 = vector.load %arg2[%c2, %c0_10, %c0_11] : memref<9x256x128xbf16, #tpu.memory_space<vmem>>, vector<1x256x128xbf16>
    %12 = vector.shape_cast %11 : vector<1x256x128xbf16> to vector<256x128xbf16>
    %13 = arith.extf %12 : vector<256x128xbf16> to vector<256x128xf32>
    %cst_12 = arith.constant dense<0.000000e+00> : vector<8x128xf32>
    %14 = tpu.matmul %0, %13, %cst_12 {dimension_numbers = #tpu.dot_dimension_numbers<[1], [0], [0], [1], [0, 0, 1, 1], [], []>} : vector<8x256xf32>, vector<256x128xf32>, vector<8x128xf32> -> vector<8x128xf32>
    %c16 = arith.constant 16 : index
    %c0_13 = arith.constant 0 : index
    %15 = vector.load %arg10[%c16, %c0_13] : memref<72x128xf32, #tpu.memory_space<vmem>>, vector<8x128xf32>
    tpu.vector_store %arg10[%c16, %c0_13], %14 {strides = array<i32>} : memref<72x128xf32, #tpu.memory_space<vmem>>, vector<8x128xf32>,
    %c3 = arith.constant 3 : index
    %c0_14 = arith.constant 0 : index
    %c0_15 = arith.constant 0 : index
    %16 = vector.load %arg2[%c3, %c0_14, %c0_15] : memref<9x256x128xbf16, #tpu.memory_space<vmem>>, vector<1x256x128xbf16>
    %17 = vector.shape_cast %16 : vector<1x256x128xbf16> to vector<256x128xbf16>
    %18 = arith.extf %17 : vector<256x128xbf16> to vector<256x128xf32>
    %cst_16 = arith.constant dense<0.000000e+00> : vector<8x128xf32>
    %19 = tpu.matmul %0, %18, %cst_16 {dimension_numbers = #tpu.dot_dimension_numbers<[1], [0], [0], [1], [0, 0, 1, 1], [], []>} : vector<8x256xf32>, vector<256x128xf32>, vector<8x128xf32> -> vector<8x128xf32>
    %c24 = arith.constant 24 : index
    %c0_17 = arith.constant 0 : index
    %20 = vector.load %arg10[%c24, %c0_17] : memref<72x128xf32, #tpu.memory_space<vmem>>, vector<8x128xf32>
    tpu.vector_store %arg10[%c24, %c0_17], %19 {strides = array<i32>} : memref<72x128xf32, #tpu.memory_space<vmem>>, vector<8x128xf32>,
    %c4 = arith.constant 4 : index
    %c0_18 = arith.constant 0 : index
    %c0_19 = arith.constant 0 : index
    %21 = vector.load %arg2[%c4, %c0_18, %c0_19] : memref<9x256x128xbf16, #tpu.memory_space<vmem>>, vector<1x256x128xbf16>
    %22 = vector.shape_cast %21 : vector<1x256x128xbf16> to vector<256x128xbf16>
    %23 = arith.extf %22 : vector<256x128xbf16> to vector<256x128xf32>
    %cst_20 = arith.constant dense<0.000000e+00> : vector<8x128xf32>
    %24 = tpu.matmul %0, %23, %cst_20 {dimension_numbers = #tpu.dot_dimension_numbers<[1], [0], [0], [1], [0, 0, 1, 1], [], []>} : vector<8x256xf32>, vector<256x128xf32>, vector<8x128xf32> -> vector<8x128xf32>
    %c32 = arith.constant 32 : index
    %c0_21 = arith.constant 0 : index
    %25 = vector.load %arg10[%c32, %c0_21] : memref<72x128xf32, #tpu.memory_space<vmem>>, vector<8x128xf32>
    tpu.vector_store %arg10[%c32, %c0_21], %24 {strides = array<i32>} : memref<72x128xf32, #tpu.memory_space<vmem>>, vector<8x128xf32>,
    %c5 = arith.constant 5 : index
    %c0_22 = arith.constant 0 : index
    %c0_23 = arith.constant 0 : index
    %26 = vector.load %arg2[%c5, %c0_22, %c0_23] : memref<9x256x128xbf16, #tpu.memory_space<vmem>>, vector<1x256x128xbf16>
    %27 = vector.shape_cast %26 : vector<1x256x128xbf16> to vector<256x128xbf16>
    %28 = arith.extf %27 : vector<256x128xbf16> to vector<256x128xf32>
    %cst_24 = arith.constant dense<0.000000e+00> : vector<8x128xf32>
    %29 = tpu.matmul %0, %28, %cst_24 {dimension_numbers = #tpu.dot_dimension_numbers<[1], [0], [0], [1], [0, 0, 1, 1], [], []>} : vector<8x256xf32>, vector<256x128xf32>, vector<8x128xf32> -> vector<8x128xf32>
    %c40 = arith.constant 40 : index
    %c0_25 = arith.constant 0 : index
    %30 = vector.load %arg10[%c40, %c0_25] : memref<72x128xf32, #tpu.memory_space<vmem>>, vector<8x128xf32>
    tpu.vector_store %arg10[%c40, %c0_25], %29 {strides = array<i32>} : memref<72x128xf32, #tpu.memory_space<vmem>>, vector<8x128xf32>,
    %c6 = arith.constant 6 : index
    %c0_26 = arith.constant 0 : index
    %c0_27 = arith.constant 0 : index
    %31 = vector.load %arg2[%c6, %c0_26, %c0_27] : memref<9x256x128xbf16, #tpu.memory_space<vmem>>, vector<1x256x128xbf16>
    %32 = vector.shape_cast %31 : vector<1x256x128xbf16> to vector<256x128xbf16>
    %33 = arith.extf %32 : vector<256x128xbf16> to vector<256x128xf32>
    %cst_28 = arith.constant dense<0.000000e+00> : vector<8x128xf32>
    %34 = tpu.matmul %0, %33, %cst_28 {dimension_numbers = #tpu.dot_dimension_numbers<[1], [0], [0], [1], [0, 0, 1, 1], [], []>} : vector<8x256xf32>, vector<256x128xf32>, vector<8x128xf32> -> vector<8x128xf32>
    %c48 = arith.constant 48 : index
    %c0_29 = arith.constant 0 : index
    %35 = vector.load %arg10[%c48, %c0_29] : memref<72x128xf32, #tpu.memory_space<vmem>>, vector<8x128xf32>
    tpu.vector_store %arg10[%c48, %c0_29], %34 {strides = array<i32>} : memref<72x128xf32, #tpu.memory_space<vmem>>, vector<8x128xf32>,
    %c7 = arith.constant 7 : index
    %c0_30 = arith.constant 0 : index
    %c0_31 = arith.constant 0 : index
    %36 = vector.load %arg2[%c7, %c0_30, %c0_31] : memref<9x256x128xbf16, #tpu.memory_space<vmem>>, vector<1x256x128xbf16>
    %37 = vector.shape_cast %36 : vector<1x256x128xbf16> to vector<256x128xbf16>
    %38 = arith.extf %37 : vector<256x128xbf16> to vector<256x128xf32>
    %cst_32 = arith.constant dense<0.000000e+00> : vector<8x128xf32>
    %39 = tpu.matmul %0, %38, %cst_32 {dimension_numbers = #tpu.dot_dimension_numbers<[1], [0], [0], [1], [0, 0, 1, 1], [], []>} : vector<8x256xf32>, vector<256x128xf32>, vector<8x128xf32> -> vector<8x128xf32>
    %c56 = arith.constant 56 : index
    %c0_33 = arith.constant 0 : index
    %40 = vector.load %arg10[%c56, %c0_33] : memref<72x128xf32, #tpu.memory_space<vmem>>, vector<8x128xf32>
    tpu.vector_store %arg10[%c56, %c0_33], %39 {strides = array<i32>} : memref<72x128xf32, #tpu.memory_space<vmem>>, vector<8x128xf32>,
    %c8_34 = arith.constant 8 : index
    %c0_35 = arith.constant 0 : index
    %c0_36 = arith.constant 0 : index
    %41 = vector.load %arg2[%c8_34, %c0_35, %c0_36] : memref<9x256x128xbf16, #tpu.memory_space<vmem>>, vector<1x256x128xbf16>
    %42 = vector.shape_cast %41 : vector<1x256x128xbf16> to vector<256x128xbf16>
    %43 = arith.extf %42 : vector<256x128xbf16> to vector<256x128xf32>
    %cst_37 = arith.constant dense<0.000000e+00> : vector<8x128xf32>
    %44 = tpu.matmul %0, %43, %cst_37 {dimension_numbers = #tpu.dot_dimension_numbers<[1], [0], [0], [1], [0, 0, 1, 1], [], []>} : vector<8x256xf32>, vector<256x128xf32>, vector<8x128xf32> -> vector<8x128xf32>
    %c64 = arith.constant 64 : index
    %c0_38 = arith.constant 0 : index
    %45 = vector.load %arg10[%c64, %c0_38] : memref<72x128xf32, #tpu.memory_space<vmem>>, vector<8x128xf32>
    tpu.vector_store %arg10[%c64, %c0_38], %44 {strides = array<i32>} : memref<72x128xf32, #tpu.memory_space<vmem>>, vector<8x128xf32>,
    %c0_39 = arith.constant 0 : index
    %c0_40 = arith.constant 0 : index
    %46 = vector.load %arg3[%c0_39, %c0_40] : memref<2x72xf32, #tpu.memory_space<vmem>>, vector<2x72xf32>
    %c0_41 = arith.constant 0 : index
    %c0_42 = arith.constant 0 : index
    %47 = vector.load %arg10[%c0_41, %c0_42] : memref<72x128xf32, #tpu.memory_space<vmem>>, vector<72x128xf32>
    %cst_43 = arith.constant dense<0.000000e+00> : vector<2x128xf32>
    %48 = tpu.matmul %46, %47, %cst_43 {dimension_numbers = #tpu.dot_dimension_numbers<[1], [0], [0], [1], [0, 0, 1, 1], [], []>} : vector<2x72xf32>, vector<72x128xf32>, vector<2x128xf32> -> vector<2x128xf32>
    %c0_44 = arith.constant 0 : index
    %c0_45 = arith.constant 0 : index
    %49 = vector.load %arg5[%c0_44, %c0_45] : memref<2x1xf32, #tpu.memory_space<vmem>>, vector<2x1xf32>
    %50 = vector.broadcast %49 : vector<2x1xf32> to vector<2x128xf32>
    %51 = arith.addf %48, %50 : vector<2x128xf32>
    %c0_46 = arith.constant 0 : index
    %c0_47 = arith.constant 0 : index
    %52 = vector.load %arg4[%c0_46, %c0_47] : memref<128x256xbf16, #tpu.memory_space<vmem>>, vector<128x256xbf16>
    %53 = arith.extf %52 : vector<128x256xbf16> to vector<128x256xf32>
    %cst_48 = arith.constant dense<0.000000e+00> : vector<2x256xf32>
    %54 = tpu.matmul %51, %53, %cst_48 {dimension_numbers = #tpu.dot_dimension_numbers<[1], [0], [0], [1], [0, 0, 1, 1], [], []>} : vector<2x128xf32>, vector<128x256xf32>, vector<2x256xf32> -> vector<2x256xf32>
    %cst_49 = arith.constant 0.000000e+00 : f32
    %55 = vector.broadcast %cst_49 : f32 to vector<2x256xf32>
    %56 = arith.maximumf %54, %55 : vector<2x256xf32>
    %c0_50 = arith.constant 0 : index
    %c0_51 = arith.constant 0 : index
    %57 = vector.load %arg6[%c0_50, %c0_51] : memref<1x2xf32, #tpu.memory_space<vmem>>, vector<1x2xf32>
    %cst_52 = arith.constant dense<0.000000e+00> : vector<1x256xf32>
    %58 = tpu.matmul %57, %56, %cst_52 {dimension_numbers = #tpu.dot_dimension_numbers<[1], [0], [0], [1], [0, 0, 1, 1], [], []>} : vector<1x2xf32>, vector<2x256xf32>, vector<1x256xf32> -> vector<1x256xf32>
    %c0_53 = arith.constant 0 : index
    %c0_54 = arith.constant 0 : index
    %59 = vector.load %arg7[%c0_53, %c0_54] : memref<1x1xf32, #tpu.memory_space<vmem>>, vector<1x1xf32>
    %60 = vector.broadcast %59 : vector<1x1xf32> to vector<1x256xf32>
    %61 = arith.addf %58, %60 : vector<1x256xf32>
    %62 = arith.negf %61 : vector<1x256xf32>
    %63 = math.exp %62 : vector<1x256xf32>
    %cst_55 = arith.constant 1.000000e+00 : f32
    %64 = vector.broadcast %cst_55 : f32 to vector<1x256xf32>
    %65 = arith.addf %64, %63 : vector<1x256xf32>
    %66 = arith.divf %64, %65 : vector<1x256xf32>
    %c0_56 = arith.constant 0 : index
    %c0_57 = arith.constant 0 : index
    %67 = vector.load %arg8[%c0_56, %c0_57] : memref<8x1xf32, #tpu.memory_space<vmem>>, vector<8x1xf32>
    %cst_58 = arith.constant dense<0.000000e+00> : vector<8x256xf32>
    %68 = tpu.matmul %67, %66, %cst_58 {dimension_numbers = #tpu.dot_dimension_numbers<[1], [0], [0], [1], [0, 0, 1, 1], [], []>} : vector<8x1xf32>, vector<1x256xf32>, vector<8x256xf32> -> vector<8x256xf32>
    %69 = arith.mulf %0, %68 : vector<8x256xf32>
    %c0_59 = arith.constant 0 : index
    %c0_60 = arith.constant 0 : index
    %70 = vector.load %arg9[%c0_59, %c0_60] : memref<8x256xf32, #tpu.memory_space<vmem>>, vector<8x256xf32>
    tpu.vector_store %arg9[%c0_59, %c0_60], %69 {strides = array<i32>} : memref<8x256xf32, #tpu.memory_space<vmem>>, vector<8x256xf32>,
    return
  }
  func.func @transform_0(%arg0: i32) -> (i32, i32) {
    %c0_i32 = arith.constant 0 : i32
    %c0_i32_0 = arith.constant 0 : i32
    return %arg0, %c0_i32 : i32, i32
  }
  func.func @transform_1(%arg0: i32) -> (i32, i32, i32) {
    %c0_i32 = arith.constant 0 : i32
    %c0_i32_0 = arith.constant 0 : i32
    %c0_i32_1 = arith.constant 0 : i32
    %c0_i32_2 = arith.constant 0 : i32
    return %c0_i32, %c0_i32_0, %c0_i32_1 : i32, i32, i32
  }
  func.func @transform_2(%arg0: i32) -> (i32, i32) {
    %c0_i32 = arith.constant 0 : i32
    %c0_i32_0 = arith.constant 0 : i32
    %c0_i32_1 = arith.constant 0 : i32
    return %c0_i32, %c0_i32_0 : i32, i32
  }
  func.func @transform_3(%arg0: i32) -> (i32, i32) {
    %c0_i32 = arith.constant 0 : i32
    %c0_i32_0 = arith.constant 0 : i32
    %c0_i32_1 = arith.constant 0 : i32
    return %c0_i32, %c0_i32_0 : i32, i32
  }
  func.func @transform_4(%arg0: i32) -> (i32, i32) {
    %c0_i32 = arith.constant 0 : i32
    %c0_i32_0 = arith.constant 0 : i32
    %c0_i32_1 = arith.constant 0 : i32
    return %c0_i32, %c0_i32_0 : i32, i32
  }
  func.func @transform_5(%arg0: i32) -> (i32, i32) {
    %c0_i32 = arith.constant 0 : i32
    %c0_i32_0 = arith.constant 0 : i32
    %c0_i32_1 = arith.constant 0 : i32
    return %c0_i32, %c0_i32_0 : i32, i32
  }
  func.func @transform_6(%arg0: i32) -> (i32, i32) {
    %c0_i32 = arith.constant 0 : i32
    %c0_i32_0 = arith.constant 0 : i32
    %c0_i32_1 = arith.constant 0 : i32
    return %c0_i32, %c0_i32_0 : i32, i32
  }
  func.func @transform_7(%arg0: i32) -> (i32, i32) {
    %c0_i32 = arith.constant 0 : i32
    %c0_i32_0 = arith.constant 0 : i32
    %c0_i32_1 = arith.constant 0 : i32
    return %c0_i32, %c0_i32_0 : i32, i32
  }
  func.func @transform_8(%arg0: i32) -> (i32, i32) {
    %c0_i32 = arith.constant 0 : i32
    %c0_i32_0 = arith.constant 0 : i32
    return %arg0, %c0_i32 : i32, i32
  }
}

</mosaic_0001>

<llo_original>
// kernel: polar_transform_attention.1
$region0: #{polar_transform_attention.1}
  #allocation0 [shape = 'u32[]', space=smem, size = 0x4, offset = 0x4, fixed_abs, tag = 'smem constant byte address 0x4 - core index']
  #allocation1 [shape = 'u32[144,128]{1,0:T(1,128)}', space=vmem, size = 0x12000, scoped, tag = 'internal scratch']
  #allocation2 [shape = 'f32[72,128]{1,0:T(8,128)}', space=vmem, size = 0x9000, scoped, tag = 'scratch operand']
  #allocation3 [shape = 'f32[1,1]{1,0:T(1,128)S(1)}', space=vmem, size = 0x200, scoped, tag = 'scoped memory for polar_transform_attention.1']
  %s0 = inlined_call_operand.vmem [shape: f32[16,256], index: 0, kind: input, shape index: {}]
  %s1 = inlined_call_operand.hbm [shape: bf16[9,256,128], index: 1, kind: input, shape index: {}]
  %s2 = inlined_call_operand.vmem [shape: f32[2,72], index: 2, kind: input, shape index: {}]
  %s3 = inlined_call_operand.vmem [shape: bf16[128,256], index: 3, kind: input, shape index: {}]
  %s4 = inlined_call_operand.vmem [shape: f32[2,1], index: 4, kind: input, shape index: {}]
  %s5 = inlined_call_operand.vmem [shape: f32[1,2], index: 5, kind: input, shape index: {}]
  %s6 = inlined_call_operand.<no memory space> [shape: f32[1,1], index: 6, kind: input, shape index: {}]
  %s7 = inlined_call_operand.vmem [shape: f32[8,1], index: 7, kind: input, shape index: {}]
  %s8 = inlined_call_operand.vmem [shape: f32[16,256], index: 8, kind: output, shape index: {}]
  %s9 = sld [smem:[#allocation0]]
  $region69: #{polar_transform_attention.1} parent=0
    _
  %s11 = ssub.s32 1, %s9
  %s12 = scalar_select 0, %s11, %s9
  %v13 = vstv %s6
  %14 = vst [vmem:[#allocation3] sm:$0x1] %v13
  $region1: #{polar_transform_attention.1} parent=0
    #allocation4 [shape = 'u8[589824]{0}', space=vmem, size = 0x90000, scoped, tag = 'input window, operand 1, single buffered']
    #allocation5 [shape = 's32[2]{0}', space=sflag, size = 0x8, scoped, tag = 'scoped memory for polar_transform_attention.1']
    %15 = vsyncpa [#allocation5], 0
    loop: start=0, step=1, limit=4
    $region2: #{polar_transform_attention.1} parent=1 // loop_pre_header
      _
    $region3: #{polar_transform_attention.1} parent=1 // loop_header
      %s17 = sphi 0, %s21
      %p18 = scmp.ge.s32.totalorder %s17, 4
      %s27 = sphi 0, %s29
      %s30 = sphi 0, %s27
      %s31 = sphi 0, %s30
      %s47 = sphi 0, %s31
      %s51 = sphi 0, %s51
      %s53 = sphi 0, %s51
      %s54 = sphi 0, %s53
      %s68 = sphi 0, %s54
      %s72 = sphi 0, %s72
      %s74 = sphi 0, %s72
      %s75 = sphi 0, %s74
      %s89 = sphi 0, %s75
      %s93 = sphi 0, %s93
      %s95 = sphi 0, %s93
      %s96 = sphi 0, %s95
      %s110 = sphi 0, %s96
      %s114 = sphi 0, %s114
      %s116 = sphi 0, %s114
      %s117 = sphi 0, %s116
      %s131 = sphi 0, %s117
      %s135 = sphi 0, %s135
      %s137 = sphi 0, %s135
      %s138 = sphi 0, %s137
      %s152 = sphi 0, %s138
      %s156 = sphi 0, %s156
      %s158 = sphi 0, %s156
      %s159 = sphi 0, %s158
      %s173 = sphi 0, %s159
      %s177 = sphi 0, %s177
      %s179 = sphi 0, %s177
      %s180 = sphi 0, %s179
      %s194 = sphi 0, %s180
      %s200 = sphi 0, %s202
      %s203 = sphi 0, %s200
      %s204 = sphi 0, %s203
      %s220 = sphi 0, %s204
    $region4: #{polar_transform_attention.1} parent=1 // loop_header_branch
      %20 = sbr.rel (%p18) target = $region8
    $region5: #{polar_transform_attention.1} parent=1 // loop_body
      %s22 = ssub.s32 %s17, 1
      %s23 = ssub.s32 %s17, 2
      %s24 = sadd.s32 %s17, 1
      %s25 = ssub.s32 %s17, %s24
      %p26 = scmp.eq.s32.totalorder %s25, 0
      %s28 = sadd.s32 %s27, 1
      %s29 = scalar_select %p26, %s27, %s28
      %p32 = pneg %p26
      %p33 = scmp.eq.s32.totalorder %s17, 1
      %p34 = por %p32, %p33
      %p35 = scmp.ne.s32.totalorder %s27, %s30
      %p36 = scmp.eq.s32.totalorder %s17, 0
      %p37 = por %p35, %p36
      %p38 = scmp.ne.s32.totalorder %s27, %s30
      %p39 = scmp.eq.s32.totalorder %s22, 1
      %p40 = por %p38, %p39
      %p41 = scmp.ne.s32.totalorder %s30, %s31
      %p42 = scmp.eq.s32.totalorder %s22, 0
      %p43 = por %p41, %p42
      %p44 = scmp.ne.s32.totalorder %s30, %s31
      %p45 = scmp.eq.s32.totalorder %s23, 1
      %p46 = por %p44, %p45
      %p48 = scmp.ne.s32.totalorder %s31, %s47
      %p49 = scmp.eq.s32.totalorder %s23, 0
      %p50 = por %p48, %p49
      %s52 = sadd.s32 %s51, 1
      %p55 = scmp.eq.s32.totalorder %s17, 1
      %p56 = scmp.ne.s32.totalorder %s51, %s53
      %p57 = scmp.eq.s32.totalorder %s17, 0
      %p58 = por %p56, %p57
      %p59 = scmp.ne.s32.totalorder %s51, %s53
      %p60 = scmp.eq.s32.totalorder %s22, 1
      %p61 = por %p59, %p60
      %p62 = scmp.ne.s32.totalorder %s53, %s54
      %p63 = scmp.eq.s32.totalorder %s22, 0
      %p64 = por %p62, %p63
      %p65 = scmp.ne.s32.totalorder %s53, %s54
      %p66 = scmp.eq.s32.totalorder %s23, 1
      %p67 = por %p65, %p66
      %p69 = scmp.ne.s32.totalorder %s54, %s68
      %p70 = scmp.eq.s32.totalorder %s23, 0
      %p71 = por %p69, %p70
      %s73 = sadd.s32 %s72, 1
      %p76 = scmp.eq.s32.totalorder %s17, 1
      %p77 = scmp.ne.s32.totalorder %s72, %s74
      %p78 = scmp.eq.s32.totalorder %s17, 0
      %p79 = por %p77, %p78
      %p80 = scmp.ne.s32.totalorder %s72, %s74
      %p81 = scmp.eq.s32.totalorder %s22, 1
      %p82 = por %p80, %p81
      %p83 = scmp.ne.s32.totalorder %s74, %s75
      %p84 = scmp.eq.s32.totalorder %s22, 0
      %p85 = por %p83, %p84
      %p86 = scmp.ne.s32.totalorder %s74, %s75
      %p87 = scmp.eq.s32.totalorder %s23, 1
      %p88 = por %p86, %p87
      %p90 = scmp.ne.s32.totalorder %s75, %s89
      %p91 = scmp.eq.s32.totalorder %s23, 0
      %p92 = por %p90, %p91
      %s94 = sadd.s32 %s93, 1
      %p97 = scmp.eq.s32.totalorder %s17, 1
      %p98 = scmp.ne.s32.totalorder %s93, %s95
      %p99 = scmp.eq.s32.totalorder %s17, 0
      %p100 = por %p98, %p99
      %p101 = scmp.ne.s32.totalorder %s93, %s95
      %p102 = scmp.eq.s32.totalorder %s22, 1
      %p103 = por %p101, %p102
      %p104 = scmp.ne.s32.totalorder %s95, %s96
      %p105 = scmp.eq.s32.totalorder %s22, 0
      %p106 = por %p104, %p105
      %p107 = scmp.ne.s32.totalorder %s95, %s96
      %p108 = scmp.eq.s32.totalorder %s23, 1
      %p109 = por %p107, %p108
      %p111 = scmp.ne.s32.totalorder %s96, %s110
      %p112 = scmp.eq.s32.totalorder %s23, 0
      %p113 = por %p111, %p112
      %s115 = sadd.s32 %s114, 1
      %p118 = scmp.eq.s32.totalorder %s17, 1
      %p119 = scmp.ne.s32.totalorder %s114, %s116
      %p120 = scmp.eq.s32.totalorder %s17, 0
      %p121 = por %p119, %p120
      %p122 = scmp.ne.s32.totalorder %s114, %s116
      %p123 = scmp.eq.s32.totalorder %s22, 1
      %p124 = por %p122, %p123
      %p125 = scmp.ne.s32.totalorder %s116, %s117
      %p126 = scmp.eq.s32.totalorder %s22, 0
      %p127 = por %p125, %p126
      %p128 = scmp.ne.s32.totalorder %s116, %s117
      %p129 = scmp.eq.s32.totalorder %s23, 1
      %p130 = por %p128, %p129
      %p132 = scmp.ne.s32.totalorder %s117, %s131
      %p133 = scmp.eq.s32.totalorder %s23, 0
      %p134 = por %p132, %p133
      %s136 = sadd.s32 %s135, 1
      %p139 = scmp.eq.s32.totalorder %s17, 1
      %p140 = scmp.ne.s32.totalorder %s135, %s137
      %p141 = scmp.eq.s32.totalorder %s17, 0
      %p142 = por %p140, %p141
      %p143 = scmp.ne.s32.totalorder %s135, %s137
      %p144 = scmp.eq.s32.totalorder %s22, 1
      %p145 = por %p143, %p144
      %p146 = scmp.ne.s32.totalorder %s137, %s138
      %p147 = scmp.eq.s32.totalorder %s22, 0
      %p148 = por %p146, %p147
      %p149 = scmp.ne.s32.totalorder %s137, %s138
      %p150 = scmp.eq.s32.totalorder %s23, 1
      %p151 = por %p149, %p150
      %p153 = scmp.ne.s32.totalorder %s138, %s152
      %p154 = scmp.eq.s32.totalorder %s23, 0
      %p155 = por %p153, %p154
      %s157 = sadd.s32 %s156, 1
      %p160 = scmp.eq.s32.totalorder %s17, 1
      %p161 = scmp.ne.s32.totalorder %s156, %s158
      %p162 = scmp.eq.s32.totalorder %s17, 0
      %p163 = por %p161, %p162
      %p164 = scmp.ne.s32.totalorder %s156, %s158
      %p165 = scmp.eq.s32.totalorder %s22, 1
      %p166 = por %p164, %p165
      %p167 = scmp.ne.s32.totalorder %s158, %s159
      %p168 = scmp.eq.s32.totalorder %s22, 0
      %p169 = por %p167, %p168
      %p170 = scmp.ne.s32.totalorder %s158, %s159
      %p171 = scmp.eq.s32.totalorder %s23, 1
      %p172 = por %p170, %p171
      %p174 = scmp.ne.s32.totalorder %s159, %s173
      %p175 = scmp.eq.s32.totalorder %s23, 0
      %p176 = por %p174, %p175
      %s178 = sadd.s32 %s177, 1
      %p181 = scmp.eq.s32.totalorder %s17, 1
      %p182 = scmp.ne.s32.totalorder %s177, %s179
      %p183 = scmp.eq.s32.totalorder %s17, 0
      %p184 = por %p182, %p183
      %p185 = scmp.ne.s32.totalorder %s177, %s179
      %p186 = scmp.eq.s32.totalorder %s22, 1
      %p187 = por %p185, %p186
      %p188 = scmp.ne.s32.totalorder %s179, %s180
      %p189 = scmp.eq.s32.totalorder %s22, 0
      %p190 = por %p188, %p189
      %p191 = scmp.ne.s32.totalorder %s179, %s180
      %p192 = scmp.eq.s32.totalorder %s23, 1
      %p193 = por %p191, %p192
      %p195 = scmp.ne.s32.totalorder %s180, %s194
      %p196 = scmp.eq.s32.totalorder %s23, 0
      %p197 = por %p195, %p196
      %s198 = ssub.s32 %s17, %s24
      %p199 = scmp.eq.s32.totalorder %s198, 0
      %s201 = sadd.s32 %s200, 1
      %s202 = scalar_select %p199, %s200, %s201
      %p205 = pneg %p199
      %p206 = scmp.eq.s32.totalorder %s17, 1
      %p207 = por %p205, %p206
      %p208 = scmp.ne.s32.totalorder %s200, %s203
      %p209 = scmp.eq.s32.totalorder %s17, 0
      %p210 = por %p208, %p209
      %p211 = scmp.ne.s32.totalorder %s200, %s203
      %p212 = scmp.eq.s32.totalorder %s22, 1
      %p213 = por %p211, %p212
      %p214 = scmp.ne.s32.totalorder %s203, %s204
      %p215 = scmp.eq.s32.totalorder %s22, 0
      %p216 = por %p214, %p215
      %p217 = scmp.ne.s32.totalorder %s203, %s204
      %p218 = scmp.eq.s32.totalorder %s23, 1
      %p219 = por %p217, %p218
      %p221 = scmp.ne.s32.totalorder %s204, %s220
      %p222 = scmp.eq.s32.totalorder %s23, 0
      %p223 = por %p221, %p222
      %p224 = scmp.le.s32.totalorder 1, %s17
      %p225 = scmp.lt.s32.totalorder %s17, 3
      %p226 = pnand %p224, %p225
      %p227 = pneg %p226
      // Predicated region
      $region9: #{polar_transform_attention.1} parent=5 // pred_check
        _
      $region10: #{polar_transform_attention.1} parent=5 // pred_check_branch
        %229 = sbr.rel (%p226) target = $region12
      $region11: #{polar_transform_attention.1} parent=5 // pred_region
        %s230 = ssub.s32 %s17, 1
        // Predicated region
        $region13: #{polar_transform_attention.1} parent=11 // pred_check
          %p231 = pneg %p64
        $region14: #{polar_transform_attention.1} parent=11 // pred_check_branch
          %233 = sbr.rel (%p231) target = $region16
        $region15: #{polar_transform_attention.1} parent=11 // pred_region
          %s235 = ssub.s32 18432, 18432
          %236 = vsyncadd [#allocation5], %s235
          %s237 = sshll.u32 [#allocation4], 4
          %s238 = int_to_ptr.vmem [resolvable:$true] %s237
          %243 = dma.hbm_to_vmem [thread:$0]  %s1, 18432, %s238, [#allocation5], 64, 64, 4
        $region16: #{polar_transform_attention.1} parent=11 // pred_fallthru
          _
        // Predicated region
        $region17: #{polar_transform_attention.1} parent=11 // pred_check
          %p244 = pneg %p85
        $region18: #{polar_transform_attention.1} parent=11 // pred_check_branch
          %246 = sbr.rel (%p244) target = $region20
        $region19: #{polar_transform_attention.1} parent=11 // pred_region
          _
        $region20: #{polar_transform_attention.1} parent=11 // pred_fallthru
          _
        // Predicated region
        $region21: #{polar_transform_attention.1} parent=11 // pred_check
          %p247 = pneg %p106
        $region22: #{polar_transform_attention.1} parent=11 // pred_check_branch
          %249 = sbr.rel (%p247) target = $region24
        $region23: #{polar_transform_attention.1} parent=11 // pred_region
          _
        $region24: #{polar_transform_attention.1} parent=11 // pred_fallthru
          _
        // Predicated region
        $region25: #{polar_transform_attention.1} parent=11 // pred_check
          %p250 = pneg %p127
        $region26: #{polar_transform_attention.1} parent=11 // pred_check_branch
          %252 = sbr.rel (%p250) target = $region28
        $region27: #{polar_transform_attention.1} parent=11 // pred_region
          _
        $region28: #{polar_transform_attention.1} parent=11 // pred_fallthru
          _
        // Predicated region
        $region29: #{polar_transform_attention.1} parent=11 // pred_check
          %p253 = pneg %p148
        $region30: #{polar_transform_attention.1} parent=11 // pred_check_branch
          %255 = sbr.rel (%p253) target = $region32
        $region31: #{polar_transform_attention.1} parent=11 // pred_region
          _
        $region32: #{polar_transform_attention.1} parent=11 // pred_fallthru
          _
        // Predicated region
        $region33: #{polar_transform_attention.1} parent=11 // pred_check
          %p256 = pneg %p169
        $region34: #{polar_transform_attention.1} parent=11 // pred_check_branch
          %258 = sbr.rel (%p256) target = $region36
        $region35: #{polar_transform_attention.1} parent=11 // pred_region
          _
        $region36: #{polar_transform_attention.1} parent=11 // pred_fallthru
          _
        // Predicated region
        $region37: #{polar_transform_attention.1} parent=11 // pred_check
          %p259 = pneg %p190
        $region38: #{polar_transform_attention.1} parent=11 // pred_check_branch
          %261 = sbr.rel (%p259) target = $region40
        $region39: #{polar_transform_attention.1} parent=11 // pred_region
          _
        $region40: #{polar_transform_attention.1} parent=11 // pred_fallthru
          _
      $region12: #{polar_transform_attention.1} parent=5 // pred_fallthru
        _
      %p262 = scmp.lt.s32.totalorder %s17, 2
      // Predicated region
      $region41: #{polar_transform_attention.1} parent=5 // pred_check
        %p263 = pneg %p262
      $region42: #{polar_transform_attention.1} parent=5 // pred_check_branch
        %265 = sbr.rel (%p263) target = $region44
      $region43: #{polar_transform_attention.1} parent=5 // pred_region
        // Predicated region
        $region45: #{polar_transform_attention.1} parent=43 // pred_check
          %p266 = pneg %p37
        $region46: #{polar_transform_attention.1} parent=43 // pred_check_branch
          %268 = sbr.rel (%p266) target = $region48
        $region47: #{polar_transform_attention.1} parent=43 // pred_region
          %p269 = scmp.lt.s32.totalorder %s17, 1
          %s270 = scalar_select %p269, %s17, 1
          %s271 = smul.addr %s270, 2
          %s272 = smul.addr %s271, 8
          %s273 = scalar_lea.vmem %s0, %s272
        $region48: #{polar_transform_attention.1} parent=43 // pred_fallthru
          _
      $region44: #{polar_transform_attention.1} parent=5 // pred_fallthru
        _
      %p274 = scmp.le.s32.totalorder 1, %s17
      %p275 = scmp.lt.s32.totalorder %s17, 3
      %p276 = pnand %p274, %p275
      %p277 = pneg %p276
      // Predicated region
      $region49: #{polar_transform_attention.1} parent=5 // pred_check
        _
      $region50: #{polar_transform_attention.1} parent=5 // pred_check_branch
        %279 = sbr.rel (%p276) target = $region52
      $region51: #{polar_transform_attention.1} parent=5 // pred_region
        %s280 = ssub.s32 %s17, 1
        // Predicated region
        $region53: #{polar_transform_attention.1} parent=51 // pred_check
          %p281 = pneg %p64
        $region54: #{polar_transform_attention.1} parent=51 // pred_check_branch
          %283 = sbr.rel (%p281) target = $region56
        $region55: #{polar_transform_attention.1} parent=51 // pred_region
          %284 = dma.done [#allocation5], 18432
        $region56: #{polar_transform_attention.1} parent=51 // pred_fallthru
          _
        %p285 = scmp.lt.s32.totalorder %s22, 1
        %s286 = scalar_select %p285, %s22, 1
        %s287 = smul.addr %s286, 2
        %s288 = smul.addr %s287, 8
        %s289 = scalar_lea.vmem %s0, %s288
        %p290 = pneg %p43
        %p291 = pneg %p40
        %p292 = pneg %p64
        %p293 = pneg %p61
        %p294 = pneg %p85
        %p295 = pneg %p82
        %p296 = pneg %p106
        %p297 = pneg %p103
        %p298 = pneg %p127
        %p299 = pneg %p124
        %p300 = pneg %p148
        %p301 = pneg %p145
        %p302 = pneg %p169
        %p303 = pneg %p166
        %p304 = pneg %p190
        %p305 = pneg %p187
        %p306 = pneg %p216
        %p307 = pneg %p213
        %p308 = scmp.lt.s32.totalorder %s22, 1
        %s309 = scalar_select %p308, %s22, 1
        %s310 = smul.addr %s309, 2
        %s311 = smul.addr %s310, 8
        %s312 = scalar_lea.vmem %s8, %s311
        %p313 = scmp.lt.s32.totalorder %s22, 1
        %s314 = scalar_select %p313, %s22, 1
        %s315 = smul.addr %s314, 2
        %s316 = smul.addr %s315, 8
        %s317 = scalar_lea.vmem %s0, %s316
        %p318 = scmp.lt.s32.totalorder %s22, 1
        %s319 = scalar_select %p318, %s22, 1
        %s320 = smul.addr %s319, 2
        %s321 = smul.addr %s320, 8
        %s322 = scalar_lea.vmem %s8, %s321
        %v323 = vld [vmem:[%s317] sm:$0xff]
        %v324 = vld [vmem:[%s317 + $0x8] sm:$0xff]
        %v325 = vld [vmem:[#allocation4] sm:$0xf]
        %v326 = vld [vmem:[#allocation4 + $0x4] sm:$0xf]
        %v327 = vld [vmem:[#allocation4 + $0x8] sm:$0xf]
        %v328 = vld [vmem:[#allocation4 + $0xc] sm:$0xf]
        %v329 = vld [vmem:[#allocation4 + $0x10] sm:$0xf]
        %v330 = vld [vmem:[#allocation4 + $0x14] sm:$0xf]
        %v331 = vld [vmem:[#allocation4 + $0x18] sm:$0xf]
        %v332 = vld [vmem:[#allocation4 + $0x1c] sm:$0xf]
        %v333 = vld [vmem:[#allocation4 + $0x20] sm:$0xf]
        %v334 = vld [vmem:[#allocation4 + $0x24] sm:$0xf]
        %v335 = vld [vmem:[#allocation4 + $0x28] sm:$0xf]
        %v336 = vld [vmem:[#allocation4 + $0x2c] sm:$0xf]
        %v337 = vld [vmem:[#allocation4 + $0x30] sm:$0xf]
        %v338 = vld [vmem:[#allocation4 + $0x34] sm:$0xf]
        %v339 = vld [vmem:[#allocation4 + $0x38] sm:$0xf]
        %v340 = vld [vmem:[#allocation4 + $0x3c] sm:$0xf]
        %v341 = vld [vmem:[#allocation4 + $0x40] sm:$0xf]
        %v342 = vld [vmem:[#allocation4 + $0x44] sm:$0xf]
        %v343 = vld [vmem:[#allocation4 + $0x48] sm:$0xf]
        %v344 = vld [vmem:[#allocation4 + $0x4c] sm:$0xf]
        %v345 = vld [vmem:[#allocation4 + $0x50] sm:$0xf]
        %v346 = vld [vmem:[#allocation4 + $0x54] sm:$0xf]
        %v347 = vld [vmem:[#allocation4 + $0x58] sm:$0xf]
        %v348 = vld [vmem:[#allocation4 + $0x5c] sm:$0xf]
        %v349 = vld [vmem:[#allocation4 + $0x60] sm:$0xf]
        %v350 = vld [vmem:[#allocation4 + $0x64] sm:$0xf]
        %v351 = vld [vmem:[#allocation4 + $0x68] sm:$0xf]
        %v352 = vld [vmem:[#allocation4 + $0x6c] sm:$0xf]
        %v353 = vld [vmem:[#allocation4 + $0x70] sm:$0xf]
        %v354 = vld [vmem:[#allocation4 + $0x74] sm:$0xf]
        %v355 = vld [vmem:[#allocation4 + $0x78] sm:$0xf]
        %v356 = vld [vmem:[#allocation4 + $0x7c] sm:$0xf]
        %v357 = vunpack.c.l.bf16 %v325
        %v358 = vunpack.c.l.bf16 %v326
        %v359 = vunpack.c.l.bf16 %v327
        %v360 = vunpack.c.l.bf16 %v328
        %v361 = vunpack.c.l.bf16 %v329
        %v362 = vunpack.c.l.bf16 %v330
        %v363 = vunpack.c.l.bf16 %v331
        %v364 = vunpack.c.l.bf16 %v332
        %v365 = vunpack.c.l.bf16 %v333
        %v366 = vunpack.c.l.bf16 %v334
        %v367 = vunpack.c.l.bf16 %v335
        %v368 = vunpack.c.l.bf16 %v336
        %v369 = vunpack.c.l.bf16 %v337
        %v370 = vunpack.c.l.bf16 %v338
        %v371 = vunpack.c.l.bf16 %v339
        %v372 = vunpack.c.l.bf16 %v340
        %v373 = vunpack.c.l.bf16 %v341
        %v374 = vunpack.c.l.bf16 %v342
        %v375 = vunpack.c.l.bf16 %v343
        %v376 = vunpack.c.l.bf16 %v344
        %v377 = vunpack.c.l.bf16 %v345
        %v378 = vunpack.c.l.bf16 %v346
        %v379 = vunpack.c.l.bf16 %v347
        %v380 = vunpack.c.l.bf16 %v348
        %v381 = vunpack.c.l.bf16 %v349
        %v382 = vunpack.c.l.bf16 %v350
        %v383 = vunpack.c.l.bf16 %v351
        %v384 = vunpack.c.l.bf16 %v352
        %v385 = vunpack.c.l.bf16 %v353
        %v386 = vunpack.c.l.bf16 %v354
        %v387 = vunpack.c.l.bf16 %v355
        %v388 = vunpack.c.l.bf16 %v356
        %389 = vmatprep.subr.mxu0 0.0
        %390 = vmatpush1.msra.mxu0 %v357
        %391 = vmatprep.subr.mxu0 0.0
        %392 = vmatpush1.msra.mxu0 %v358
        %393 = vmatprep.subr.mxu0 0.0
        %394 = vmatpush1.msra.mxu0 %v359
        %395 = vmatprep.subr.mxu0 0.0
        %396 = vmatpush1.msra.mxu0 %v360
        %397 = vmatprep.subr.mxu0 0.0
        %398 = vmatpush1.msra.mxu0 %v361
        %399 = vmatprep.subr.mxu0 0.0
        %400 = vmatpush1.msra.mxu0 %v362
        %401 = vmatprep.subr.mxu0 0.0
        %402 = vmatpush1.msra.mxu0 %v363
        %403 = vmatprep.subr.mxu0 0.0
        %404 = vmatpush1.msra.mxu0 %v364
        %405 = vmatprep.subr.mxu0 0.0
        %406 = vmatpush1.msra.mxu0 %v365
        %407 = vmatprep.subr.mxu0 0.0
        %408 = vmatpush1.msra.mxu0 %v366
        %409 = vmatprep.subr.mxu0 0.0
        %410 = vmatpush1.msra.mxu0 %v367
        %411 = vmatprep.subr.mxu0 0.0
        %412 = vmatpush1.msra.mxu0 %v368
        %413 = vmatprep.subr.mxu0 0.0
        %414 = vmatpush1.msra.mxu0 %v369
        %415 = vmatprep.subr.mxu0 0.0
        %416 = vmatpush1.msra.mxu0 %v370
        %417 = vmatprep.subr.mxu0 0.0
        %418 = vmatpush1.msra.mxu0 %v371
        %419 = vmatprep.subr.mxu0 0.0
        %420 = vmatpush1.msra.mxu0 %v372
        %421 = vmatprep.subr.mxu0 0.0
        %422 = vmatpush1.msra.mxu0 %v373
        %423 = vmatprep.subr.mxu0 0.0
        %424 = vmatpush1.msra.mxu0 %v374
        %425 = vmatprep.subr.mxu0 0.0
        %426 = vmatpush1.msra.mxu0 %v375
        %427 = vmatprep.subr.mxu0 0.0
        %428 = vmatpush1.msra.mxu0 %v376
        %429 = vmatprep.subr.mxu0 0.0
        %430 = vmatpush1.msra.mxu0 %v377
        %431 = vmatprep.subr.mxu0 0.0
        %432 = vmatpush1.msra.mxu0 %v378
        %433 = vmatprep.subr.mxu0 0.0
        %434 = vmatpush1.msra.mxu0 %v379
        %435 = vmatprep.subr.mxu0 0.0
        %436 = vmatpush1.msra.mxu0 %v380
        %437 = vmatprep.subr.mxu0 0.0
        %438 = vmatpush1.msra.mxu0 %v381
        %439 = vmatprep.subr.mxu0 0.0
        %440 = vmatpush1.msra.mxu0 %v382
        %441 = vmatprep.subr.mxu0 0.0
        %442 = vmatpush1.msra.mxu0 %v383
        %443 = vmatprep.subr.mxu0 0.0
        %444 = vmatpush1.msra.mxu0 %v384
        %445 = vmatprep.subr.mxu0 0.0
        %446 = vmatpush1.msra.mxu0 %v385
        %447 = vmatprep.subr.mxu0 0.0
        %448 = vmatpush1.msra.mxu0 %v386
        %449 = vmatprep.subr.mxu0 0.0
        %450 = vmatpush1.msra.mxu0 %v387
        %451 = vmatprep.subr.mxu0 0.0
        %452 = vmatpush1.msra.mxu0 %v388
        %453 = vmatprep.mubr.f32.mxu0 %v324
        %454 = vmatmul.mubr.f32.gmra.mrb[0].mxu0 %v323
        %v455 = vpop.f32.mrb[0].mxu0
        %v456 = vadd.f32 0.0, %v455
        %v457 = vpop.f32.mrb[0].mxu0
        %458 = vdwg.mxu0
        %459 = vst [vmem:[#allocation2] sm:$0xff] %v456
        %s460 = scalar_lea.vmem [#allocation4], 128
        %v461 = vld [vmem:[%s460] sm:$0xf]
        %v462 = vld [vmem:[%s460 + $0x4] sm:$0xf]
        %v463 = vld [vmem:[%s460 + $0x8] sm:$0xf]
        %v464 = vld [vmem:[%s460 + $0xc] sm:$0xf]
        %v465 = vld [vmem:[%s460 + $0x10] sm:$0xf]
        %v466 = vld [vmem:[%s460 + $0x14] sm:$0xf]
        %v467 = vld [vmem:[%s460 + $0x18] sm:$0xf]
        %v468 = vld [vmem:[%s460 + $0x1c] sm:$0xf]
        %v469 = vld [vmem:[%s460 + $0x20] sm:$0xf]
        %v470 = vld [vmem:[%s460 + $0x24] sm:$0xf]
        %v471 = vld [vmem:[%s460 + $0x28] sm:$0xf]
        %v472 = vld [vmem:[%s460 + $0x2c] sm:$0xf]
        %v473 = vld [vmem:[%s460 + $0x30] sm:$0xf]
        %v474 = vld [vmem:[%s460 + $0x34] sm:$0xf]
        %v475 = vld [vmem:[%s460 + $0x38] sm:$0xf]
        %v476 = vld [vmem:[%s460 + $0x3c] sm:$0xf]
        %v477 = vld [vmem:[%s460 + $0x40] sm:$0xf]
        %v478 = vld [vmem:[%s460 + $0x44] sm:$0xf]
        %v479 = vld [vmem:[%s460 + $0x48] sm:$0xf]
        %v480 = vld [vmem:[%s460 + $0x4c] sm:$0xf]
        %v481 = vld [vmem:[%s460 + $0x50] sm:$0xf]
        %v482 = vld [vmem:[%s460 + $0x54] sm:$0xf]
        %v483 = vld [vmem:[%s460 + $0x58] sm:$0xf]
        %v484 = vld [vmem:[%s460 + $0x5c] sm:$0xf]
        %v485 = vld [vmem:[%s460 + $0x60] sm:$0xf]
        %v486 = vld [vmem:[%s460 + $0x64] sm:$0xf]
        %v487 = vld [vmem:[%s460 + $0x68] sm:$0xf]
        %v488 = vld [vmem:[%s460 + $0x6c] sm:$0xf]
        %v489 = vld [vmem:[%s460 + $0x70] sm:$0xf]
        %v490 = vld [vmem:[%s460 + $0x74] sm:$0xf]
        %v491 = vld [vmem:[%s460 + $0x78] sm:$0xf]
        %v492 = vld [vmem:[%s460 + $0x7c] sm:$0xf]
        %v493 = vunpack.c.l.bf16 %v461
        %v494 = vunpack.c.l.bf16 %v462
        %v495 = vunpack.c.l.bf16 %v463
        %v496 = vunpack.c.l.bf16 %v464
        %v497 = vunpack.c.l.bf16 %v465
        %v498 = vunpack.c.l.bf16 %v466
        %v499 = vunpack.c.l.bf16 %v467
        %v500 = vunpack.c.l.bf16 %v468
        %v501 = vunpack.c.l.bf16 %v469
        %v502 = vunpack.c.l.bf16 %v470
        %v503 = vunpack.c.l.bf16 %v471
        %v504 = vunpack.c.l.bf16 %v472
        %v505 = vunpack.c.l.bf16 %v473
        %v506 = vunpack.c.l.bf16 %v474
        %v507 = vunpack.c.l.bf16 %v475
        %v508 = vunpack.c.l.bf16 %v476
        %v509 = vunpack.c.l.bf16 %v477
        %v510 = vunpack.c.l.bf16 %v478
        %v511 = vunpack.c.l.bf16 %v479
        %v512 = vunpack.c.l.bf16 %v480
        %v513 = vunpack.c.l.bf16 %v481
        %v514 = vunpack.c.l.bf16 %v482
        %v515 = vunpack.c.l.bf16 %v483
        %v516 = vunpack.c.l.bf16 %v484
        %v517 = vunpack.c.l.bf16 %v485
        %v518 = vunpack.c.l.bf16 %v486
        %v519 = vunpack.c.l.bf16 %v487
        %v520 = vunpack.c.l.bf16 %v488
        %v521 = vunpack.c.l.bf16 %v489
        %v522 = vunpack.c.l.bf16 %v490
        %v523 = vunpack.c.l.bf16 %v491
        %v524 = vunpack.c.l.bf16 %v492
        %525 = vmatprep.subr.mxu0 0.0
        %526 = vmatpush1.msra.mxu0 %v493
        %527 = vmatprep.subr.mxu0 0.0
        %528 = vmatpush1.msra.mxu0 %v494
        %529 = vmatprep.subr.mxu0 0.0
        %530 = vmatpush1.msra.mxu0 %v495
        %531 = vmatprep.subr.mxu0 0.0
        %532 = vmatpush1.msra.mxu0 %v496
        %533 = vmatprep.subr.mxu0 0.0
        %534 = vmatpush1.msra.mxu0 %v497
        %535 = vmatprep.subr.mxu0 0.0
        %536 = vmatpush1.msra.mxu0 %v498
        %537 = vmatprep.subr.mxu0 0.0
        %538 = vmatpush1.msra.mxu0 %v499
        %539 = vmatprep.subr.mxu0 0.0
        %540 = vmatpush1.msra.mxu0 %v500
        %541 = vmatprep.subr.mxu0 0.0
        %542 = vmatpush1.msra.mxu0 %v501
        %543 = vmatprep.subr.mxu0 0.0
        %544 = vmatpush1.msra.mxu0 %v502
        %545 = vmatprep.subr.mxu0 0.0
        %546 = vmatpush1.msra.mxu0 %v503
        %547 = vmatprep.subr.mxu0 0.0
        %548 = vmatpush1.msra.mxu0 %v504
        %549 = vmatprep.subr.mxu0 0.0
        %550 = vmatpush1.msra.mxu0 %v505
        %551 = vmatprep.subr.mxu0 0.0
        %552 = vmatpush1.msra.mxu0 %v506
        %553 = vmatprep.subr.mxu0 0.0
        %554 = vmatpush1.msra.mxu0 %v507
        %555 = vmatprep.subr.mxu0 0.0
        %556 = vmatpush1.msra.mxu0 %v508
        %557 = vmatprep.subr.mxu0 0.0
        %558 = vmatpush1.msra.mxu0 %v509
        %559 = vmatprep.subr.mxu0 0.0
        %560 = vmatpush1.msra.mxu0 %v510
        %561 = vmatprep.subr.mxu0 0.0
        %562 = vmatpush1.msra.mxu0 %v511
        %563 = vmatprep.subr.mxu0 0.0
        %564 = vmatpush1.msra.mxu0 %v512
        %565 = vmatprep.subr.mxu0 0.0
        %566 = vmatpush1.msra.mxu0 %v513
        %567 = vmatprep.subr.mxu0 0.0
        %568 = vmatpush1.msra.mxu0 %v514
        %569 = vmatprep.subr.mxu0 0.0
        %570 = vmatpush1.msra.mxu0 %v515
        %571 = vmatprep.subr.mxu0 0.0
        %572 = vmatpush1.msra.mxu0 %v516
        %573 = vmatprep.subr.mxu0 0.0
        %574 = vmatpush1.msra.mxu0 %v517
        %575 = vmatprep.subr.mxu0 0.0
        %576 = vmatpush1.msra.mxu0 %v518
        %577 = vmatprep.subr.mxu0 0.0
        %578 = vmatpush1.msra.mxu0 %v519
        %579 = vmatprep.subr.mxu0 0.0
        %580 = vmatpush1.msra.mxu0 %v520
        %581 = vmatprep.subr.mxu0 0.0
        %582 = vmatpush1.msra.mxu0 %v521
        %583 = vmatprep.subr.mxu0 0.0
        %584 = vmatpush1.msra.mxu0 %v522
        %585 = vmatprep.subr.mxu0 0.0
        %586 = vmatpush1.msra.mxu0 %v523
        %587 = vmatprep.subr.mxu0 0.0
        %588 = vmatpush1.msra.mxu0 %v524
        %589 = vmatprep.mubr.f32.mxu0 %v324
        %590 = vmatmul.mubr.f32.gmra.mrb[0].mxu0 %v323
        %v591 = vpop.f32.mrb[0].mxu0
        %v592 = vadd.f32 0.0, %v591
        %v593 = vpop.f32.mrb[0].mxu0
        %594 = vdwg.mxu0
        %595 = vst [vmem:[#allocation2 + $0x8] sm:$0xff] %v592
        %s596 = scalar_lea.vmem [#allocation4], 256
        %v597 = vld [vmem:[%s596] sm:$0xf]
        %v598 = vld [vmem:[%s596 + $0x4] sm:$0xf]
        %v599 = vld [vmem:[%s596 + $0x8] sm:$0xf]
        %v600 = vld [vmem:[%s596 + $0xc] sm:$0xf]
        %v601 = vld [vmem:[%s596 + $0x10] sm:$0xf]
        %v602 = vld [vmem:[%s596 + $0x14] sm:$0xf]
        %v603 = vld [vmem:[%s596 + $0x18] sm:$0xf]
        %v604 = vld [vmem:[%s596 + $0x1c] sm:$0xf]
        %v605 = vld [vmem:[%s596 + $0x20] sm:$0xf]
        %v606 = vld [vmem:[%s596 + $0x24] sm:$0xf]
        %v607 = vld [vmem:[%s596 + $0x28] sm:$0xf]
        %v608 = vld [vmem:[%s596 + $0x2c] sm:$0xf]
        %v609 = vld [vmem:[%s596 + $0x30] sm:$0xf]
        %v610 = vld [vmem:[%s596 + $0x34] sm:$0xf]
        %v611 = vld [vmem:[%s596 + $0x38] sm:$0xf]
        %v612 = vld [vmem:[%s596 + $0x3c] sm:$0xf]
        %v613 = vld [vmem:[%s596 + $0x40] sm:$0xf]
        %v614 = vld [vmem:[%s596 + $0x44] sm:$0xf]
        %v615 = vld [vmem:[%s596 + $0x48] sm:$0xf]
        %v616 = vld [vmem:[%s596 + $0x4c] sm:$0xf]
        %v617 = vld [vmem:[%s596 + $0x50] sm:$0xf]
        %v618 = vld [vmem:[%s596 + $0x54] sm:$0xf]
        %v619 = vld [vmem:[%s596 + $0x58] sm:$0xf]
        %v620 = vld [vmem:[%s596 + $0x5c] sm:$0xf]
        %v621 = vld [vmem:[%s596 + $0x60] sm:$0xf]
        %v622 = vld [vmem:[%s596 + $0x64] sm:$0xf]
        %v623 = vld [vmem:[%s596 + $0x68] sm:$0xf]
        %v624 = vld [vmem:[%s596 + $0x6c] sm:$0xf]
        %v625 = vld [vmem:[%s596 + $0x70] sm:$0xf]
        %v626 = vld [vmem:[%s596 + $0x74] sm:$0xf]
        %v627 = vld [vmem:[%s596 + $0x78] sm:$0xf]
        %v628 = vld [vmem:[%s596 + $0x7c] sm:$0xf]
        %v629 = vunpack.c.l.bf16 %v597
        %v630 = vunpack.c.l.bf16 %v598
        %v631 = vunpack.c.l.bf16 %v599
        %v632 = vunpack.c.l.bf16 %v600
        %v633 = vunpack.c.l.bf16 %v601
        %v634 = vunpack.c.l.bf16 %v602
        %v635 = vunpack.c.l.bf16 %v603
        %v636 = vunpack.c.l.bf16 %v604
        %v637 = vunpack.c.l.bf16 %v605
        %v638 = vunpack.c.l.bf16 %v606
        %v639 = vunpack.c.l.bf16 %v607
        %v640 = vunpack.c.l.bf16 %v608
        %v641 = vunpack.c.l.bf16 %v609
        %v642 = vunpack.c.l.bf16 %v610
        %v643 = vunpack.c.l.bf16 %v611
        %v644 = vunpack.c.l.bf16 %v612
        %v645 = vunpack.c.l.bf16 %v613
        %v646 = vunpack.c.l.bf16 %v614
        %v647 = vunpack.c.l.bf16 %v615
        %v648 = vunpack.c.l.bf16 %v616
        %v649 = vunpack.c.l.bf16 %v617
        %v650 = vunpack.c.l.bf16 %v618
        %v651 = vunpack.c.l.bf16 %v619
        %v652 = vunpack.c.l.bf16 %v620
        %v653 = vunpack.c.l.bf16 %v621
        %v654 = vunpack.c.l.bf16 %v622
        %v655 = vunpack.c.l.bf16 %v623
        %v656 = vunpack.c.l.bf16 %v624
        %v657 = vunpack.c.l.bf16 %v625
        %v658 = vunpack.c.l.bf16 %v626
        %v659 = vunpack.c.l.bf16 %v627
        %v660 = vunpack.c.l.bf16 %v628
        %661 = vmatprep.subr.mxu0 0.0
        %662 = vmatpush1.msra.mxu0 %v629
        %663 = vmatprep.subr.mxu0 0.0
        %664 = vmatpush1.msra.mxu0 %v630
        %665 = vmatprep.subr.mxu0 0.0
        %666 = vmatpush1.msra.mxu0 %v631
        %667 = vmatprep.subr.mxu0 0.0
        %668 = vmatpush1.msra.mxu0 %v632
        %669 = vmatprep.subr.mxu0 0.0
        %670 = vmatpush1.msra.mxu0 %v633
        %671 = vmatprep.subr.mxu0 0.0
        %672 = vmatpush1.msra.mxu0 %v634
        %673 = vmatprep.subr.mxu0 0.0
        %674 = vmatpush1.msra.mxu0 %v635
        %675 = vmatprep.subr.mxu0 0.0
        %676 = vmatpush1.msra.mxu0 %v636
        %677 = vmatprep.subr.mxu0 0.0
        %678 = vmatpush1.msra.mxu0 %v637
        %679 = vmatprep.subr.mxu0 0.0
        %680 = vmatpush1.msra.mxu0 %v638
        %681 = vmatprep.subr.mxu0 0.0
        %682 = vmatpush1.msra.mxu0 %v639
        %683 = vmatprep.subr.mxu0 0.0
        %684 = vmatpush1.msra.mxu0 %v640
        %685 = vmatprep.subr.mxu0 0.0
        %686 = vmatpush1.msra.mxu0 %v641
        %687 = vmatprep.subr.mxu0 0.0
        %688 = vmatpush1.msra.mxu0 %v642
        %689 = vmatprep.subr.mxu0 0.0
        %690 = vmatpush1.msra.mxu0 %v643
        %691 = vmatprep.subr.mxu0 0.0
        %692 = vmatpush1.msra.mxu0 %v644
        %693 = vmatprep.subr.mxu0 0.0
        %694 = vmatpush1.msra.mxu0 %v645
        %695 = vmatprep.subr.mxu0 0.0
        %696 = vmatpush1.msra.mxu0 %v646
        %697 = vmatprep.subr.mxu0 0.0
        %698 = vmatpush1.msra.mxu0 %v647
        %699 = vmatprep.subr.mxu0 0.0
        %700 = vmatpush1.msra.mxu0 %v648
        %701 = vmatprep.subr.mxu0 0.0
        %702 = vmatpush1.msra.mxu0 %v649
        %703 = vmatprep.subr.mxu0 0.0
        %704 = vmatpush1.msra.mxu0 %v650
        %705 = vmatprep.subr.mxu0 0.0
        %706 = vmatpush1.msra.mxu0 %v651
        %707 = vmatprep.subr.mxu0 0.0
        %708 = vmatpush1.msra.mxu0 %v652
        %709 = vmatprep.subr.mxu0 0.0
        %710 = vmatpush1.msra.mxu0 %v653
        %711 = vmatprep.subr.mxu0 0.0
        %712 = vmatpush1.msra.mxu0 %v654
        %713 = vmatprep.subr.mxu0 0.0
        %714 = vmatpush1.msra.mxu0 %v655
        %715 = vmatprep.subr.mxu0 0.0
        %716 = vmatpush1.msra.mxu0 %v656
        %717 = vmatprep.subr.mxu0 0.0
        %718 = vmatpush1.msra.mxu0 %v657
        %719 = vmatprep.subr.mxu0 0.0
        %720 = vmatpush1.msra.mxu0 %v658
        %721 = vmatprep.subr.mxu0 0.0
        %722 = vmatpush1.msra.mxu0 %v659
        %723 = vmatprep.subr.mxu0 0.0
        %724 = vmatpush1.msra.mxu0 %v660
        %725 = vmatprep.mubr.f32.mxu0 %v324
        %726 = vmatmul.mubr.f32.gmra.mrb[0].mxu0 %v323
        %v727 = vpop.f32.mrb[0].mxu0
        %v728 = vadd.f32 0.0, %v727
        %v729 = vpop.f32.mrb[0].mxu0
        %730 = vdwg.mxu0
        %731 = vst [vmem:[#allocation2 + $0x10] sm:$0xff] %v728
        %s732 = scalar_lea.vmem [#allocation4], 384
        %v733 = vld [vmem:[%s732] sm:$0xf]
        %v734 = vld [vmem:[%s732 + $0x4] sm:$0xf]
        %v735 = vld [vmem:[%s732 + $0x8] sm:$0xf]
        %v736 = vld [vmem:[%s732 + $0xc] sm:$0xf]
        %v737 = vld [vmem:[%s732 + $0x10] sm:$0xf]
        %v738 = vld [vmem:[%s732 + $0x14] sm:$0xf]
        %v739 = vld [vmem:[%s732 + $0x18] sm:$0xf]
        %v740 = vld [vmem:[%s732 + $0x1c] sm:$0xf]
        %v741 = vld [vmem:[%s732 + $0x20] sm:$0xf]
        %v742 = vld [vmem:[%s732 + $0x24] sm:$0xf]
        %v743 = vld [vmem:[%s732 + $0x28] sm:$0xf]
        %v744 = vld [vmem:[%s732 + $0x2c] sm:$0xf]
        %v745 = vld [vmem:[%s732 + $0x30] sm:$0xf]
        %v746 = vld [vmem:[%s732 + $0x34] sm:$0xf]
        %v747 = vld [vmem:[%s732 + $0x38] sm:$0xf]
        %v748 = vld [vmem:[%s732 + $0x3c] sm:$0xf]
        %v749 = vld [vmem:[%s732 + $0x40] sm:$0xf]
        %v750 = vld [vmem:[%s732 + $0x44] sm:$0xf]
        %v751 = vld [vmem:[%s732 + $0x48] sm:$0xf]
        %v752 = vld [vmem:[%s732 + $0x4c] sm:$0xf]
        %v753 = vld [vmem:[%s732 + $0x50] sm:$0xf]
        %v754 = vld [vmem:[%s732 + $0x54] sm:$0xf]
        %v755 = vld [vmem:[%s732 + $0x58] sm:$0xf]
        %v756 = vld [vmem:[%s732 + $0x5c] sm:$0xf]
        %v757 = vld [vmem:[%s732 + $0x60] sm:$0xf]
        %v758 = vld [vmem:[%s732 + $0x64] sm:$0xf]
        %v759 = vld [vmem:[%s732 + $0x68] sm:$0xf]
        %v760 = vld [vmem:[%s732 + $0x6c] sm:$0xf]
        %v761 = vld [vmem:[%s732 + $0x70] sm:$0xf]
        %v762 = vld [vmem:[%s732 + $0x74] sm:$0xf]
        %v763 = vld [vmem:[%s732 + $0x78] sm:$0xf]
        %v764 = vld [vmem:[%s732 + $0x7c] sm:$0xf]
        %v765 = vunpack.c.l.bf16 %v733
        %v766 = vunpack.c.l.bf16 %v734
        %v767 = vunpack.c.l.bf16 %v735
        %v768 = vunpack.c.l.bf16 %v736
        %v769 = vunpack.c.l.bf16 %v737
        %v770 = vunpack.c.l.bf16 %v738
        %v771 = vunpack.c.l.bf16 %v739
        %v772 = vunpack.c.l.bf16 %v740
        %v773 = vunpack.c.l.bf16 %v741
        %v774 = vunpack.c.l.bf16 %v742
        %v775 = vunpack.c.l.bf16 %v743
        %v776 = vunpack.c.l.bf16 %v744
        %v777 = vunpack.c.l.bf16 %v745
        %v778 = vunpack.c.l.bf16 %v746
        %v779 = vunpack.c.l.bf16 %v747
        %v780 = vunpack.c.l.bf16 %v748
        %v781 = vunpack.c.l.bf16 %v749
        %v782 = vunpack.c.l.bf16 %v750
        %v783 = vunpack.c.l.bf16 %v751
        %v784 = vunpack.c.l.bf16 %v752
        %v785 = vunpack.c.l.bf16 %v753
        %v786 = vunpack.c.l.bf16 %v754
        %v787 = vunpack.c.l.bf16 %v755
        %v788 = vunpack.c.l.bf16 %v756
        %v789 = vunpack.c.l.bf16 %v757
        %v790 = vunpack.c.l.bf16 %v758
        %v791 = vunpack.c.l.bf16 %v759
        %v792 = vunpack.c.l.bf16 %v760
        %v793 = vunpack.c.l.bf16 %v761
        %v794 = vunpack.c.l.bf16 %v762
        %v795 = vunpack.c.l.bf16 %v763
        %v796 = vunpack.c.l.bf16 %v764
        %797 = vmatprep.subr.mxu0 0.0
        %798 = vmatpush1.msra.mxu0 %v765
        %799 = vmatprep.subr.mxu0 0.0
        %800 = vmatpush1.msra.mxu0 %v766
        %801 = vmatprep.subr.mxu0 0.0
        %802 = vmatpush1.msra.mxu0 %v767
        %803 = vmatprep.subr.mxu0 0.0
        %804 = vmatpush1.msra.mxu0 %v768
        %805 = vmatprep.subr.mxu0 0.0
        %806 = vmatpush1.msra.mxu0 %v769
        %807 = vmatprep.subr.mxu0 0.0
        %808 = vmatpush1.msra.mxu0 %v770
        %809 = vmatprep.subr.mxu0 0.0
        %810 = vmatpush1.msra.mxu0 %v771
        %811 = vmatprep.subr.mxu0 0.0
        %812 = vmatpush1.msra.mxu0 %v772
        %813 = vmatprep.subr.mxu0 0.0
        %814 = vmatpush1.msra.mxu0 %v773
        %815 = vmatprep.subr.mxu0 0.0
        %816 = vmatpush1.msra.mxu0 %v774
        %817 = vmatprep.subr.mxu0 0.0
        %818 = vmatpush1.msra.mxu0 %v775
        %819 = vmatprep.subr.mxu0 0.0
        %820 = vmatpush1.msra.mxu0 %v776
        %821 = vmatprep.subr.mxu0 0.0
        %822 = vmatpush1.msra.mxu0 %v777
        %823 = vmatprep.subr.mxu0 0.0
        %824 = vmatpush1.msra.mxu0 %v778
        %825 = vmatprep.subr.mxu0 0.0
        %826 = vmatpush1.msra.mxu0 %v779
        %827 = vmatprep.subr.mxu0 0.0
        %828 = vmatpush1.msra.mxu0 %v780
        %829 = vmatprep.subr.mxu0 0.0
        %830 = vmatpush1.msra.mxu0 %v781
        %831 = vmatprep.subr.mxu0 0.0
        %832 = vmatpush1.msra.mxu0 %v782
        %833 = vmatprep.subr.mxu0 0.0
        %834 = vmatpush1.msra.mxu0 %v783
        %835 = vmatprep.subr.mxu0 0.0
        %836 = vmatpush1.msra.mxu0 %v784
        %837 = vmatprep.subr.mxu0 0.0
        %838 = vmatpush1.msra.mxu0 %v785
        %839 = vmatprep.subr.mxu0 0.0
        %840 = vmatpush1.msra.mxu0 %v786
        %841 = vmatprep.subr.mxu0 0.0
        %842 = vmatpush1.msra.mxu0 %v787
        %843 = vmatprep.subr.mxu0 0.0
        %844 = vmatpush1.msra.mxu0 %v788
        %845 = vmatprep.subr.mxu0 0.0
        %846 = vmatpush1.msra.mxu0 %v789
        %847 = vmatprep.subr.mxu0 0.0
        %848 = vmatpush1.msra.mxu0 %v790
        %849 = vmatprep.subr.mxu0 0.0
        %850 = vmatpush1.msra.mxu0 %v791
        %851 = vmatprep.subr.mxu0 0.0
        %852 = vmatpush1.msra.mxu0 %v792
        %853 = vmatprep.subr.mxu0 0.0
        %854 = vmatpush1.msra.mxu0 %v793
        %855 = vmatprep.subr.mxu0 0.0
        %856 = vmatpush1.msra.mxu0 %v794
        %857 = vmatprep.subr.mxu0 0.0
        %858 = vmatpush1.msra.mxu0 %v795
        %859 = vmatprep.subr.mxu0 0.0
        %860 = vmatpush1.msra.mxu0 %v796
        %861 = vmatprep.mubr.f32.mxu0 %v324
        %862 = vmatmul.mubr.f32.gmra.mrb[0].mxu0 %v323
        %v863 = vpop.f32.mrb[0].mxu0
        %v864 = vadd.f32 0.0, %v863
        %v865 = vpop.f32.mrb[0].mxu0
        %866 = vdwg.mxu0
        %867 = vst [vmem:[#allocation2 + $0x18] sm:$0xff] %v864
        %s868 = scalar_lea.vmem [#allocation4], 512
        %v869 = vld [vmem:[%s868] sm:$0xf]
        %v870 = vld [vmem:[%s868 + $0x4] sm:$0xf]
        %v871 = vld [vmem:[%s868 + $0x8] sm:$0xf]
        %v872 = vld [vmem:[%s868 + $0xc] sm:$0xf]
        %v873 = vld [vmem:[%s868 + $0x10] sm:$0xf]
        %v874 = vld [vmem:[%s868 + $0x14] sm:$0xf]
        %v875 = vld [vmem:[%s868 + $0x18] sm:$0xf]
        %v876 = vld [vmem:[%s868 + $0x1c] sm:$0xf]
        %v877 = vld [vmem:[%s868 + $0x20] sm:$0xf]
        %v878 = vld [vmem:[%s868 + $0x24] sm:$0xf]
        %v879 = vld [vmem:[%s868 + $0x28] sm:$0xf]
        %v880 = vld [vmem:[%s868 + $0x2c] sm:$0xf]
        %v881 = vld [vmem:[%s868 + $0x30] sm:$0xf]
        %v882 = vld [vmem:[%s868 + $0x34] sm:$0xf]
        %v883 = vld [vmem:[%s868 + $0x38] sm:$0xf]
        %v884 = vld [vmem:[%s868 + $0x3c] sm:$0xf]
        %v885 = vld [vmem:[%s868 + $0x40] sm:$0xf]
        %v886 = vld [vmem:[%s868 + $0x44] sm:$0xf]
        %v887 = vld [vmem:[%s868 + $0x48] sm:$0xf]
        %v888 = vld [vmem:[%s868 + $0x4c] sm:$0xf]
        %v889 = vld [vmem:[%s868 + $0x50] sm:$0xf]
        %v890 = vld [vmem:[%s868 + $0x54] sm:$0xf]
        %v891 = vld [vmem:[%s868 + $0x58] sm:$0xf]
        %v892 = vld [vmem:[%s868 + $0x5c] sm:$0xf]
        %v893 = vld [vmem:[%s868 + $0x60] sm:$0xf]
        %v894 = vld [vmem:[%s868 + $0x64] sm:$0xf]
        %v895 = vld [vmem:[%s868 + $0x68] sm:$0xf]
        %v896 = vld [vmem:[%s868 + $0x6c] sm:$0xf]
        %v897 = vld [vmem:[%s868 + $0x70] sm:$0xf]
        %v898 = vld [vmem:[%s868 + $0x74] sm:$0xf]
        %v899 = vld [vmem:[%s868 + $0x78] sm:$0xf]
        %v900 = vld [vmem:[%s868 + $0x7c] sm:$0xf]
        %v901 = vunpack.c.l.bf16 %v869
        %v902 = vunpack.c.l.bf16 %v870
        %v903 = vunpack.c.l.bf16 %v871
        %v904 = vunpack.c.l.bf16 %v872
        %v905 = vunpack.c.l.bf16 %v873
        %v906 = vunpack.c.l.bf16 %v874
        %v907 = vunpack.c.l.bf16 %v875
        %v908 = vunpack.c.l.bf16 %v876
        %v909 = vunpack.c.l.bf16 %v877
        %v910 = vunpack.c.l.bf16 %v878
        %v911 = vunpack.c.l.bf16 %v879
        %v912 = vunpack.c.l.bf16 %v880
        %v913 = vunpack.c.l.bf16 %v881
        %v914 = vunpack.c.l.bf16 %v882
        %v915 = vunpack.c.l.bf16 %v883
        %v916 = vunpack.c.l.bf16 %v884
        %v917 = vunpack.c.l.bf16 %v885
        %v918 = vunpack.c.l.bf16 %v886
        %v919 = vunpack.c.l.bf16 %v887
        %v920 = vunpack.c.l.bf16 %v888
        %v921 = vunpack.c.l.bf16 %v889
        %v922 = vunpack.c.l.bf16 %v890
        %v923 = vunpack.c.l.bf16 %v891
        %v924 = vunpack.c.l.bf16 %v892
        %v925 = vunpack.c.l.bf16 %v893
        %v926 = vunpack.c.l.bf16 %v894
        %v927 = vunpack.c.l.bf16 %v895
        %v928 = vunpack.c.l.bf16 %v896
        %v929 = vunpack.c.l.bf16 %v897
        %v930 = vunpack.c.l.bf16 %v898
        %v931 = vunpack.c.l.bf16 %v899
        %v932 = vunpack.c.l.bf16 %v900
        %933 = vmatprep.subr.mxu0 0.0
        %934 = vmatpush1.msra.mxu0 %v901
        %935 = vmatprep.subr.mxu0 0.0
        %936 = vmatpush1.msra.mxu0 %v902
        %937 = vmatprep.subr.mxu0 0.0
        %938 = vmatpush1.msra.mxu0 %v903
        %939 = vmatprep.subr.mxu0 0.0
        %940 = vmatpush1.msra.mxu0 %v904
        %941 = vmatprep.subr.mxu0 0.0
        %942 = vmatpush1.msra.mxu0 %v905
        %943 = vmatprep.subr.mxu0 0.0
        %944 = vmatpush1.msra.mxu0 %v906
        %945 = vmatprep.subr.mxu0 0.0
        %946 = vmatpush1.msra.mxu0 %v907
        %947 = vmatprep.subr.mxu0 0.0
        %948 = vmatpush1.msra.mxu0 %v908
        %949 = vmatprep.subr.mxu0 0.0
        %950 = vmatpush1.msra.mxu0 %v909
        %951 = vmatprep.subr.mxu0 0.0
        %952 = vmatpush1.msra.mxu0 %v910
        %953 = vmatprep.subr.mxu0 0.0
        %954 = vmatpush1.msra.mxu0 %v911
        %955 = vmatprep.subr.mxu0 0.0
        %956 = vmatpush1.msra.mxu0 %v912
        %957 = vmatprep.subr.mxu0 0.0
        %958 = vmatpush1.msra.mxu0 %v913
        %959 = vmatprep.subr.mxu0 0.0
        %960 = vmatpush1.msra.mxu0 %v914
        %961 = vmatprep.subr.mxu0 0.0
        %962 = vmatpush1.msra.mxu0 %v915
        %963 = vmatprep.subr.mxu0 0.0
        %964 = vmatpush1.msra.mxu0 %v916
        %965 = vmatprep.subr.mxu0 0.0
        %966 = vmatpush1.msra.mxu0 %v917
        %967 = vmatprep.subr.mxu0 0.0
        %968 = vmatpush1.msra.mxu0 %v918
        %969 = vmatprep.subr.mxu0 0.0
        %970 = vmatpush1.msra.mxu0 %v919
        %971 = vmatprep.subr.mxu0 0.0
        %972 = vmatpush1.msra.mxu0 %v920
        %973 = vmatprep.subr.mxu0 0.0
        %974 = vmatpush1.msra.mxu0 %v921
        %975 = vmatprep.subr.mxu0 0.0
        %976 = vmatpush1.msra.mxu0 %v922
        %977 = vmatprep.subr.mxu0 0.0
        %978 = vmatpush1.msra.mxu0 %v923
        %979 = vmatprep.subr.mxu0 0.0
        %980 = vmatpush1.msra.mxu0 %v924
        %981 = vmatprep.subr.mxu0 0.0
        %982 = vmatpush1.msra.mxu0 %v925
        %983 = vmatprep.subr.mxu0 0.0
        %984 = vmatpush1.msra.mxu0 %v926
        %985 = vmatprep.subr.mxu0 0.0
        %986 = vmatpush1.msra.mxu0 %v927
        %987 = vmatprep.subr.mxu0 0.0
        %988 = vmatpush1.msra.mxu0 %v928
        %989 = vmatprep.subr.mxu0 0.0
        %990 = vmatpush1.msra.mxu0 %v929
        %991 = vmatprep.subr.mxu0 0.0
        %992 = vmatpush1.msra.mxu0 %v930
        %993 = vmatprep.subr.mxu0 0.0
        %994 = vmatpush1.msra.mxu0 %v931
        %995 = vmatprep.subr.mxu0 0.0
        %996 = vmatpush1.msra.mxu0 %v932
        %997 = vmatprep.mubr.f32.mxu0 %v324
        %998 = vmatmul.mubr.f32.gmra.mrb[0].mxu0 %v323
        %v999 = vpop.f32.mrb[0].mxu0
        %v1000 = vadd.f32 0.0, %v999
        %v1001 = vpop.f32.mrb[0].mxu0
        %1002 = vdwg.mxu0
        %1003 = vst [vmem:[#allocation2 + $0x20] sm:$0xff] %v1000
        %s1004 = scalar_lea.vmem [#allocation4], 640
        %v1005 = vld [vmem:[%s1004] sm:$0xf]
        %v1006 = vld [vmem:[%s1004 + $0x4] sm:$0xf]
        %v1007 = vld [vmem:[%s1004 + $0x8] sm:$0xf]
        %v1008 = vld [vmem:[%s1004 + $0xc] sm:$0xf]
        %v1009 = vld [vmem:[%s1004 + $0x10] sm:$0xf]
        %v1010 = vld [vmem:[%s1004 + $0x14] sm:$0xf]
        %v1011 = vld [vmem:[%s1004 + $0x18] sm:$0xf]
        %v1012 = vld [vmem:[%s1004 + $0x1c] sm:$0xf]
        %v1013 = vld [vmem:[%s1004 + $0x20] sm:$0xf]
        %v1014 = vld [vmem:[%s1004 + $0x24] sm:$0xf]
        %v1015 = vld [vmem:[%s1004 + $0x28] sm:$0xf]
        %v1016 = vld [vmem:[%s1004 + $0x2c] sm:$0xf]
        %v1017 = vld [vmem:[%s1004 + $0x30] sm:$0xf]
        %v1018 = vld [vmem:[%s1004 + $0x34] sm:$0xf]
        %v1019 = vld [vmem:[%s1004 + $0x38] sm:$0xf]
        %v1020 = vld [vmem:[%s1004 + $0x3c] sm:$0xf]
        %v1021 = vld [vmem:[%s1004 + $0x40] sm:$0xf]
        %v1022 = vld [vmem:[%s1004 + $0x44] sm:$0xf]
        %v1023 = vld [vmem:[%s1004 + $0x48] sm:$0xf]
        %v1024 = vld [vmem:[%s1004 + $0x4c] sm:$0xf]
        %v1025 = vld [vmem:[%s1004 + $0x50] sm:$0xf]
        %v1026 = vld [vmem:[%s1004 + $0x54] sm:$0xf]
        %v1027 = vld [vmem:[%s1004 + $0x58] sm:$0xf]
        %v1028 = vld [vmem:[%s1004 + $0x5c] sm:$0xf]
        %v1029 = vld [vmem:[%s1004 + $0x60] sm:$0xf]
        %v1030 = vld [vmem:[%s1004 + $0x64] sm:$0xf]
        %v1031 = vld [vmem:[%s1004 + $0x68] sm:$0xf]
        %v1032 = vld [vmem:[%s1004 + $0x6c] sm:$0xf]
        %v1033 = vld [vmem:[%s1004 + $0x70] sm:$0xf]
        %v1034 = vld [vmem:[%s1004 + $0x74] sm:$0xf]
        %v1035 = vld [vmem:[%s1004 + $0x78] sm:$0xf]
        %v1036 = vld [vmem:[%s1004 + $0x7c] sm:$0xf]
        %v1037 = vunpack.c.l.bf16 %v1005
        %v1038 = vunpack.c.l.bf16 %v1006
        %v1039 = vunpack.c.l.bf16 %v1007
        %v1040 = vunpack.c.l.bf16 %v1008
        %v1041 = vunpack.c.l.bf16 %v1009
        %v1042 = vunpack.c.l.bf16 %v1010
        %v1043 = vunpack.c.l.bf16 %v1011
        %v1044 = vunpack.c.l.bf16 %v1012
        %v1045 = vunpack.c.l.bf16 %v1013
        %v1046 = vunpack.c.l.bf16 %v1014
        %v1047 = vunpack.c.l.bf16 %v1015
        %v1048 = vunpack.c.l.bf16 %v1016
        %v1049 = vunpack.c.l.bf16 %v1017
        %v1050 = vunpack.c.l.bf16 %v1018
        %v1051 = vunpack.c.l.bf16 %v1019
        %v1052 = vunpack.c.l.bf16 %v1020
        %v1053 = vunpack.c.l.bf16 %v1021
        %v1054 = vunpack.c.l.bf16 %v1022
        %v1055 = vunpack.c.l.bf16 %v1023
        %v1056 = vunpack.c.l.bf16 %v1024
        %v1057 = vunpack.c.l.bf16 %v1025
        %v1058 = vunpack.c.l.bf16 %v1026
        %v1059 = vunpack.c.l.bf16 %v1027
        %v1060 = vunpack.c.l.bf16 %v1028
        %v1061 = vunpack.c.l.bf16 %v1029
        %v1062 = vunpack.c.l.bf16 %v1030
        %v1063 = vunpack.c.l.bf16 %v1031
        %v1064 = vunpack.c.l.bf16 %v1032
        %v1065 = vunpack.c.l.bf16 %v1033
        %v1066 = vunpack.c.l.bf16 %v1034
        %v1067 = vunpack.c.l.bf16 %v1035
        %v1068 = vunpack.c.l.bf16 %v1036
        %1069 = vmatprep.subr.mxu0 0.0
        %1070 = vmatpush1.msra.mxu0 %v1037
        %1071 = vmatprep.subr.mxu0 0.0
        %1072 = vmatpush1.msra.mxu0 %v1038
        %1073 = vmatprep.subr.mxu0 0.0
        %1074 = vmatpush1.msra.mxu0 %v1039
        %1075 = vmatprep.subr.mxu0 0.0
        %1076 = vmatpush1.msra.mxu0 %v1040
        %1077 = vmatprep.subr.mxu0 0.0
        %1078 = vmatpush1.msra.mxu0 %v1041
        %1079 = vmatprep.subr.mxu0 0.0
        %1080 = vmatpush1.msra.mxu0 %v1042
        %1081 = vmatprep.subr.mxu0 0.0
        %1082 = vmatpush1.msra.mxu0 %v1043
        %1083 = vmatprep.subr.mxu0 0.0
        %1084 = vmatpush1.msra.mxu0 %v1044
        %1085 = vmatprep.subr.mxu0 0.0
        %1086 = vmatpush1.msra.mxu0 %v1045
        %1087 = vmatprep.subr.mxu0 0.0
        %1088 = vmatpush1.msra.mxu0 %v1046
        %1089 = vmatprep.subr.mxu0 0.0
        %1090 = vmatpush1.msra.mxu0 %v1047
        %1091 = vmatprep.subr.mxu0 0.0
        %1092 = vmatpush1.msra.mxu0 %v1048
        %1093 = vmatprep.subr.mxu0 0.0
        %1094 = vmatpush1.msra.mxu0 %v1049
        %1095 = vmatprep.subr.mxu0 0.0
        %1096 = vmatpush1.msra.mxu0 %v1050
        %1097 = vmatprep.subr.mxu0 0.0
        %1098 = vmatpush1.msra.mxu0 %v1051
        %1099 = vmatprep.subr.mxu0 0.0
        %1100 = vmatpush1.msra.mxu0 %v1052
        %1101 = vmatprep.subr.mxu0 0.0
        %1102 = vmatpush1.msra.mxu0 %v1053
        %1103 = vmatprep.subr.mxu0 0.0
        %1104 = vmatpush1.msra.mxu0 %v1054
        %1105 = vmatprep.subr.mxu0 0.0
        %1106 = vmatpush1.msra.mxu0 %v1055
        %1107 = vmatprep.subr.mxu0 0.0
        %1108 = vmatpush1.msra.mxu0 %v1056
        %1109 = vmatprep.subr.mxu0 0.0
        %1110 = vmatpush1.msra.mxu0 %v1057
        %1111 = vmatprep.subr.mxu0 0.0
        %1112 = vmatpush1.msra.mxu0 %v1058
        %1113 = vmatprep.subr.mxu0 0.0
        %1114 = vmatpush1.msra.mxu0 %v1059
        %1115 = vmatprep.subr.mxu0 0.0
        %1116 = vmatpush1.msra.mxu0 %v1060
        %1117 = vmatprep.subr.mxu0 0.0
        %1118 = vmatpush1.msra.mxu0 %v1061
        %1119 = vmatprep.subr.mxu0 0.0
        %1120 = vmatpush1.msra.mxu0 %v1062
        %1121 = vmatprep.subr.mxu0 0.0
        %1122 = vmatpush1.msra.mxu0 %v1063
        %1123 = vmatprep.subr.mxu0 0.0
        %1124 = vmatpush1.msra.mxu0 %v1064
        %1125 = vmatprep.subr.mxu0 0.0
        %1126 = vmatpush1.msra.mxu0 %v1065
        %1127 = vmatprep.subr.mxu0 0.0
        %1128 = vmatpush1.msra.mxu0 %v1066
        %1129 = vmatprep.subr.mxu0 0.0
        %1130 = vmatpush1.msra.mxu0 %v1067
        %1131 = vmatprep.subr.mxu0 0.0
        %1132 = vmatpush1.msra.mxu0 %v1068
        %1133 = vmatprep.mubr.f32.mxu0 %v324
        %1134 = vmatmul.mubr.f32.gmra.mrb[0].mxu0 %v323
        %v1135 = vpop.f32.mrb[0].mxu0
        %v1136 = vadd.f32 0.0, %v1135
        %v1137 = vpop.f32.mrb[0].mxu0
        %1138 = vdwg.mxu0
        %1139 = vst [vmem:[#allocation2 + $0x28] sm:$0xff] %v1136
        %s1140 = scalar_lea.vmem [#allocation4], 768
        %v1141 = vld [vmem:[%s1140] sm:$0xf]
        %v1142 = vld [vmem:[%s1140 + $0x4] sm:$0xf]
        %v1143 = vld [vmem:[%s1140 + $0x8] sm:$0xf]
        %v1144 = vld [vmem:[%s1140 + $0xc] sm:$0xf]
        %v1145 = vld [vmem:[%s1140 + $0x10] sm:$0xf]
        %v1146 = vld [vmem:[%s1140 + $0x14] sm:$0xf]
        %v1147 = vld [vmem:[%s1140 + $0x18] sm:$0xf]
        %v1148 = vld [vmem:[%s1140 + $0x1c] sm:$0xf]
        %v1149 = vld [vmem:[%s1140 + $0x20] sm:$0xf]
        %v1150 = vld [vmem:[%s1140 + $0x24] sm:$0xf]
        %v1151 = vld [vmem:[%s1140 + $0x28] sm:$0xf]
        %v1152 = vld [vmem:[%s1140 + $0x2c] sm:$0xf]
        %v1153 = vld [vmem:[%s1140 + $0x30] sm:$0xf]
        %v1154 = vld [vmem:[%s1140 + $0x34] sm:$0xf]
        %v1155 = vld [vmem:[%s1140 + $0x38] sm:$0xf]
        %v1156 = vld [vmem:[%s1140 + $0x3c] sm:$0xf]
        %v1157 = vld [vmem:[%s1140 + $0x40] sm:$0xf]
        %v1158 = vld [vmem:[%s1140 + $0x44] sm:$0xf]
        %v1159 = vld [vmem:[%s1140 + $0x48] sm:$0xf]
        %v1160 = vld [vmem:[%s1140 + $0x4c] sm:$0xf]
        %v1161 = vld [vmem:[%s1140 + $0x50] sm:$0xf]
        %v1162 = vld [vmem:[%s1140 + $0x54] sm:$0xf]
        %v1163 = vld [vmem:[%s1140 + $0x58] sm:$0xf]
        %v1164 = vld [vmem:[%s1140 + $0x5c] sm:$0xf]
        %v1165 = vld [vmem:[%s1140 + $0x60] sm:$0xf]
        %v1166 = vld [vmem:[%s1140 + $0x64] sm:$0xf]
        %v1167 = vld [vmem:[%s1140 + $0x68] sm:$0xf]
        %v1168 = vld [vmem:[%s1140 + $0x6c] sm:$0xf]
        %v1169 = vld [vmem:[%s1140 + $0x70] sm:$0xf]
        %v1170 = vld [vmem:[%s1140 + $0x74] sm:$0xf]
        %v1171 = vld [vmem:[%s1140 + $0x78] sm:$0xf]
        %v1172 = vld [vmem:[%s1140 + $0x7c] sm:$0xf]
        %v1173 = vunpack.c.l.bf16 %v1141
        %v1174 = vunpack.c.l.bf16 %v1142
        %v1175 = vunpack.c.l.bf16 %v1143
        %v1176 = vunpack.c.l.bf16 %v1144
        %v1177 = vunpack.c.l.bf16 %v1145
        %v1178 = vunpack.c.l.bf16 %v1146
        %v1179 = vunpack.c.l.bf16 %v1147
        %v1180 = vunpack.c.l.bf16 %v1148
        %v1181 = vunpack.c.l.bf16 %v1149
        %v1182 = vunpack.c.l.bf16 %v1150
        %v1183 = vunpack.c.l.bf16 %v1151
        %v1184 = vunpack.c.l.bf16 %v1152
        %v1185 = vunpack.c.l.bf16 %v1153
        %v1186 = vunpack.c.l.bf16 %v1154
        %v1187 = vunpack.c.l.bf16 %v1155
        %v1188 = vunpack.c.l.bf16 %v1156
        %v1189 = vunpack.c.l.bf16 %v1157
        %v1190 = vunpack.c.l.bf16 %v1158
        %v1191 = vunpack.c.l.bf16 %v1159
        %v1192 = vunpack.c.l.bf16 %v1160
        %v1193 = vunpack.c.l.bf16 %v1161
        %v1194 = vunpack.c.l.bf16 %v1162
        %v1195 = vunpack.c.l.bf16 %v1163
        %v1196 = vunpack.c.l.bf16 %v1164
        %v1197 = vunpack.c.l.bf16 %v1165
        %v1198 = vunpack.c.l.bf16 %v1166
        %v1199 = vunpack.c.l.bf16 %v1167
        %v1200 = vunpack.c.l.bf16 %v1168
        %v1201 = vunpack.c.l.bf16 %v1169
        %v1202 = vunpack.c.l.bf16 %v1170
        %v1203 = vunpack.c.l.bf16 %v1171
        %v1204 = vunpack.c.l.bf16 %v1172
        %1205 = vmatprep.subr.mxu0 0.0
        %1206 = vmatpush1.msra.mxu0 %v1173
        %1207 = vmatprep.subr.mxu0 0.0
        %1208 = vmatpush1.msra.mxu0 %v1174
        %1209 = vmatprep.subr.mxu0 0.0
        %1210 = vmatpush1.msra.mxu0 %v1175
        %1211 = vmatprep.subr.mxu0 0.0
        %1212 = vmatpush1.msra.mxu0 %v1176
        %1213 = vmatprep.subr.mxu0 0.0
        %1214 = vmatpush1.msra.mxu0 %v1177
        %1215 = vmatprep.subr.mxu0 0.0
        %1216 = vmatpush1.msra.mxu0 %v1178
        %1217 = vmatprep.subr.mxu0 0.0
        %1218 = vmatpush1.msra.mxu0 %v1179
        %1219 = vmatprep.subr.mxu0 0.0
        %1220 = vmatpush1.msra.mxu0 %v1180
        %1221 = vmatprep.subr.mxu0 0.0
        %1222 = vmatpush1.msra.mxu0 %v1181
        %1223 = vmatprep.subr.mxu0 0.0
        %1224 = vmatpush1.msra.mxu0 %v1182
        %1225 = vmatprep.subr.mxu0 0.0
        %1226 = vmatpush1.msra.mxu0 %v1183
        %1227 = vmatprep.subr.mxu0 0.0
        %1228 = vmatpush1.msra.mxu0 %v1184
        %1229 = vmatprep.subr.mxu0 0.0
        %1230 = vmatpush1.msra.mxu0 %v1185
        %1231 = vmatprep.subr.mxu0 0.0
        %1232 = vmatpush1.msra.mxu0 %v1186
        %1233 = vmatprep.subr.mxu0 0.0
        %1234 = vmatpush1.msra.mxu0 %v1187
        %1235 = vmatprep.subr.mxu0 0.0
        %1236 = vmatpush1.msra.mxu0 %v1188
        %1237 = vmatprep.subr.mxu0 0.0
        %1238 = vmatpush1.msra.mxu0 %v1189
        %1239 = vmatprep.subr.mxu0 0.0
        %1240 = vmatpush1.msra.mxu0 %v1190
        %1241 = vmatprep.subr.mxu0 0.0
        %1242 = vmatpush1.msra.mxu0 %v1191
        %1243 = vmatprep.subr.mxu0 0.0
        %1244 = vmatpush1.msra.mxu0 %v1192
        %1245 = vmatprep.subr.mxu0 0.0
        %1246 = vmatpush1.msra.mxu0 %v1193
        %1247 = vmatprep.subr.mxu0 0.0
        %1248 = vmatpush1.msra.mxu0 %v1194
        %1249 = vmatprep.subr.mxu0 0.0
        %1250 = vmatpush1.msra.mxu0 %v1195
        %1251 = vmatprep.subr.mxu0 0.0
        %1252 = vmatpush1.msra.mxu0 %v1196
        %1253 = vmatprep.subr.mxu0 0.0
        %1254 = vmatpush1.msra.mxu0 %v1197
        %1255 = vmatprep.subr.mxu0 0.0
        %1256 = vmatpush1.msra.mxu0 %v1198
        %1257 = vmatprep.subr.mxu0 0.0
        %1258 = vmatpush1.msra.mxu0 %v1199
        %1259 = vmatprep.subr.mxu0 0.0
        %1260 = vmatpush1.msra.mxu0 %v1200
        %1261 = vmatprep.subr.mxu0 0.0
        %1262 = vmatpush1.msra.mxu0 %v1201
        %1263 = vmatprep.subr.mxu0 0.0
        %1264 = vmatpush1.msra.mxu0 %v1202
        %1265 = vmatprep.subr.mxu0 0.0
        %1266 = vmatpush1.msra.mxu0 %v1203
        %1267 = vmatprep.subr.mxu0 0.0
        %1268 = vmatpush1.msra.mxu0 %v1204
        %1269 = vmatprep.mubr.f32.mxu0 %v324
        %1270 = vmatmul.mubr.f32.gmra.mrb[0].mxu0 %v323
        %v1271 = vpop.f32.mrb[0].mxu0
        %v1272 = vadd.f32 0.0, %v1271
        %v1273 = vpop.f32.mrb[0].mxu0
        %1274 = vdwg.mxu0
        %1275 = vst [vmem:[#allocation2 + $0x30] sm:$0xff] %v1272
        %s1276 = scalar_lea.vmem [#allocation4], 896
        %v1277 = vld [vmem:[%s1276] sm:$0xf]
        %v1278 = vld [vmem:[%s1276 + $0x4] sm:$0xf]
        %v1279 = vld [vmem:[%s1276 + $0x8] sm:$0xf]
        %v1280 = vld [vmem:[%s1276 + $0xc] sm:$0xf]
        %v1281 = vld [vmem:[%s1276 + $0x10] sm:$0xf]
        %v1282 = vld [vmem:[%s1276 + $0x14] sm:$0xf]
        %v1283 = vld [vmem:[%s1276 + $0x18] sm:$0xf]
        %v1284 = vld [vmem:[%s1276 + $0x1c] sm:$0xf]
        %v1285 = vld [vmem:[%s1276 + $0x20] sm:$0xf]
        %v1286 = vld [vmem:[%s1276 + $0x24] sm:$0xf]
        %v1287 = vld [vmem:[%s1276 + $0x28] sm:$0xf]
        %v1288 = vld [vmem:[%s1276 + $0x2c] sm:$0xf]
        %v1289 = vld [vmem:[%s1276 + $0x30] sm:$0xf]
        %v1290 = vld [vmem:[%s1276 + $0x34] sm:$0xf]
        %v1291 = vld [vmem:[%s1276 + $0x38] sm:$0xf]
        %v1292 = vld [vmem:[%s1276 + $0x3c] sm:$0xf]
        %v1293 = vld [vmem:[%s1276 + $0x40] sm:$0xf]
        %v1294 = vld [vmem:[%s1276 + $0x44] sm:$0xf]
        %v1295 = vld [vmem:[%s1276 + $0x48] sm:$0xf]
        %v1296 = vld [vmem:[%s1276 + $0x4c] sm:$0xf]
        %v1297 = vld [vmem:[%s1276 + $0x50] sm:$0xf]
        %v1298 = vld [vmem:[%s1276 + $0x54] sm:$0xf]
        %v1299 = vld [vmem:[%s1276 + $0x58] sm:$0xf]
        %v1300 = vld [vmem:[%s1276 + $0x5c] sm:$0xf]
        %v1301 = vld [vmem:[%s1276 + $0x60] sm:$0xf]
        %v1302 = vld [vmem:[%s1276 + $0x64] sm:$0xf]
        %v1303 = vld [vmem:[%s1276 + $0x68] sm:$0xf]
        %v1304 = vld [vmem:[%s1276 + $0x6c] sm:$0xf]
        %v1305 = vld [vmem:[%s1276 + $0x70] sm:$0xf]
        %v1306 = vld [vmem:[%s1276 + $0x74] sm:$0xf]
        %v1307 = vld [vmem:[%s1276 + $0x78] sm:$0xf]
        %v1308 = vld [vmem:[%s1276 + $0x7c] sm:$0xf]
        %v1309 = vunpack.c.l.bf16 %v1277
        %v1310 = vunpack.c.l.bf16 %v1278
        %v1311 = vunpack.c.l.bf16 %v1279
        %v1312 = vunpack.c.l.bf16 %v1280
        %v1313 = vunpack.c.l.bf16 %v1281
        %v1314 = vunpack.c.l.bf16 %v1282
        %v1315 = vunpack.c.l.bf16 %v1283
        %v1316 = vunpack.c.l.bf16 %v1284
        %v1317 = vunpack.c.l.bf16 %v1285
        %v1318 = vunpack.c.l.bf16 %v1286
        %v1319 = vunpack.c.l.bf16 %v1287
        %v1320 = vunpack.c.l.bf16 %v1288
        %v1321 = vunpack.c.l.bf16 %v1289
        %v1322 = vunpack.c.l.bf16 %v1290
        %v1323 = vunpack.c.l.bf16 %v1291
        %v1324 = vunpack.c.l.bf16 %v1292
        %v1325 = vunpack.c.l.bf16 %v1293
        %v1326 = vunpack.c.l.bf16 %v1294
        %v1327 = vunpack.c.l.bf16 %v1295
        %v1328 = vunpack.c.l.bf16 %v1296
        %v1329 = vunpack.c.l.bf16 %v1297
        %v1330 = vunpack.c.l.bf16 %v1298
        %v1331 = vunpack.c.l.bf16 %v1299
        %v1332 = vunpack.c.l.bf16 %v1300
        %v1333 = vunpack.c.l.bf16 %v1301
        %v1334 = vunpack.c.l.bf16 %v1302
        %v1335 = vunpack.c.l.bf16 %v1303
        %v1336 = vunpack.c.l.bf16 %v1304
        %v1337 = vunpack.c.l.bf16 %v1305
        %v1338 = vunpack.c.l.bf16 %v1306
        %v1339 = vunpack.c.l.bf16 %v1307
        %v1340 = vunpack.c.l.bf16 %v1308
        %1341 = vmatprep.subr.mxu0 0.0
        %1342 = vmatpush1.msra.mxu0 %v1309
        %1343 = vmatprep.subr.mxu0 0.0
        %1344 = vmatpush1.msra.mxu0 %v1310
        %1345 = vmatprep.subr.mxu0 0.0
        %1346 = vmatpush1.msra.mxu0 %v1311
        %1347 = vmatprep.subr.mxu0 0.0
        %1348 = vmatpush1.msra.mxu0 %v1312
        %1349 = vmatprep.subr.mxu0 0.0
        %1350 = vmatpush1.msra.mxu0 %v1313
        %1351 = vmatprep.subr.mxu0 0.0
        %1352 = vmatpush1.msra.mxu0 %v1314
        %1353 = vmatprep.subr.mxu0 0.0
        %1354 = vmatpush1.msra.mxu0 %v1315
        %1355 = vmatprep.subr.mxu0 0.0
        %1356 = vmatpush1.msra.mxu0 %v1316
        %1357 = vmatprep.subr.mxu0 0.0
        %1358 = vmatpush1.msra.mxu0 %v1317
        %1359 = vmatprep.subr.mxu0 0.0
        %1360 = vmatpush1.msra.mxu0 %v1318
        %1361 = vmatprep.subr.mxu0 0.0
        %1362 = vmatpush1.msra.mxu0 %v1319
        %1363 = vmatprep.subr.mxu0 0.0
        %1364 = vmatpush1.msra.mxu0 %v1320
        %1365 = vmatprep.subr.mxu0 0.0
        %1366 = vmatpush1.msra.mxu0 %v1321
        %1367 = vmatprep.subr.mxu0 0.0
        %1368 = vmatpush1.msra.mxu0 %v1322
        %1369 = vmatprep.subr.mxu0 0.0
        %1370 = vmatpush1.msra.mxu0 %v1323
        %1371 = vmatprep.subr.mxu0 0.0
        %1372 = vmatpush1.msra.mxu0 %v1324
        %1373 = vmatprep.subr.mxu0 0.0
        %1374 = vmatpush1.msra.mxu0 %v1325
        %1375 = vmatprep.subr.mxu0 0.0
        %1376 = vmatpush1.msra.mxu0 %v1326
        %1377 = vmatprep.subr.mxu0 0.0
        %1378 = vmatpush1.msra.mxu0 %v1327
        %1379 = vmatprep.subr.mxu0 0.0
        %1380 = vmatpush1.msra.mxu0 %v1328
        %1381 = vmatprep.subr.mxu0 0.0
        %1382 = vmatpush1.msra.mxu0 %v1329
        %1383 = vmatprep.subr.mxu0 0.0
        %1384 = vmatpush1.msra.mxu0 %v1330
        %1385 = vmatprep.subr.mxu0 0.0
        %1386 = vmatpush1.msra.mxu0 %v1331
        %1387 = vmatprep.subr.mxu0 0.0
        %1388 = vmatpush1.msra.mxu0 %v1332
        %1389 = vmatprep.subr.mxu0 0.0
        %1390 = vmatpush1.msra.mxu0 %v1333
        %1391 = vmatprep.subr.mxu0 0.0
        %1392 = vmatpush1.msra.mxu0 %v1334
        %1393 = vmatprep.subr.mxu0 0.0
        %1394 = vmatpush1.msra.mxu0 %v1335
        %1395 = vmatprep.subr.mxu0 0.0
        %1396 = vmatpush1.msra.mxu0 %v1336
        %1397 = vmatprep.subr.mxu0 0.0
        %1398 = vmatpush1.msra.mxu0 %v1337
        %1399 = vmatprep.subr.mxu0 0.0
        %1400 = vmatpush1.msra.mxu0 %v1338
        %1401 = vmatprep.subr.mxu0 0.0
        %1402 = vmatpush1.msra.mxu0 %v1339
        %1403 = vmatprep.subr.mxu0 0.0
        %1404 = vmatpush1.msra.mxu0 %v1340
        %1405 = vmatprep.mubr.f32.mxu0 %v324
        %1406 = vmatmul.mubr.f32.gmra.mrb[0].mxu0 %v323
        %v1407 = vpop.f32.mrb[0].mxu0
        %v1408 = vadd.f32 0.0, %v1407
        %v1409 = vpop.f32.mrb[0].mxu0
        %1410 = vdwg.mxu0
        %1411 = vst [vmem:[#allocation2 + $0x38] sm:$0xff] %v1408
        %s1412 = scalar_lea.vmem [#allocation4], 1024
        %v1413 = vld [vmem:[%s1412] sm:$0xf]
        %v1414 = vld [vmem:[%s1412 + $0x4] sm:$0xf]
        %v1415 = vld [vmem:[%s1412 + $0x8] sm:$0xf]
        %v1416 = vld [vmem:[%s1412 + $0xc] sm:$0xf]
        %v1417 = vld [vmem:[%s1412 + $0x10] sm:$0xf]
        %v1418 = vld [vmem:[%s1412 + $0x14] sm:$0xf]
        %v1419 = vld [vmem:[%s1412 + $0x18] sm:$0xf]
        %v1420 = vld [vmem:[%s1412 + $0x1c] sm:$0xf]
        %v1421 = vld [vmem:[%s1412 + $0x20] sm:$0xf]
        %v1422 = vld [vmem:[%s1412 + $0x24] sm:$0xf]
        %v1423 = vld [vmem:[%s1412 + $0x28] sm:$0xf]
        %v1424 = vld [vmem:[%s1412 + $0x2c] sm:$0xf]
        %v1425 = vld [vmem:[%s1412 + $0x30] sm:$0xf]
        %v1426 = vld [vmem:[%s1412 + $0x34] sm:$0xf]
        %v1427 = vld [vmem:[%s1412 + $0x38] sm:$0xf]
        %v1428 = vld [vmem:[%s1412 + $0x3c] sm:$0xf]
        %v1429 = vld [vmem:[%s1412 + $0x40] sm:$0xf]
        %v1430 = vld [vmem:[%s1412 + $0x44] sm:$0xf]
        %v1431 = vld [vmem:[%s1412 + $0x48] sm:$0xf]
        %v1432 = vld [vmem:[%s1412 + $0x4c] sm:$0xf]
        %v1433 = vld [vmem:[%s1412 + $0x50] sm:$0xf]
        %v1434 = vld [vmem:[%s1412 + $0x54] sm:$0xf]
        %v1435 = vld [vmem:[%s1412 + $0x58] sm:$0xf]
        %v1436 = vld [vmem:[%s1412 + $0x5c] sm:$0xf]
        %v1437 = vld [vmem:[%s1412 + $0x60] sm:$0xf]
        %v1438 = vld [vmem:[%s1412 + $0x64] sm:$0xf]
        %v1439 = vld [vmem:[%s1412 + $0x68] sm:$0xf]
        %v1440 = vld [vmem:[%s1412 + $0x6c] sm:$0xf]
        %v1441 = vld [vmem:[%s1412 + $0x70] sm:$0xf]
        %v1442 = vld [vmem:[%s1412 + $0x74] sm:$0xf]
        %v1443 = vld [vmem:[%s1412 + $0x78] sm:$0xf]
        %v1444 = vld [vmem:[%s1412 + $0x7c] sm:$0xf]
        %v1445 = vunpack.c.l.bf16 %v1413
        %v1446 = vunpack.c.l.bf16 %v1414
        %v1447 = vunpack.c.l.bf16 %v1415
        %v1448 = vunpack.c.l.bf16 %v1416
        %v1449 = vunpack.c.l.bf16 %v1417
        %v1450 = vunpack.c.l.bf16 %v1418
        %v1451 = vunpack.c.l.bf16 %v1419
        %v1452 = vunpack.c.l.bf16 %v1420
        %v1453 = vunpack.c.l.bf16 %v1421
        %v1454 = vunpack.c.l.bf16 %v1422
        %v1455 = vunpack.c.l.bf16 %v1423
        %v1456 = vunpack.c.l.bf16 %v1424
        %v1457 = vunpack.c.l.bf16 %v1425
        %v1458 = vunpack.c.l.bf16 %v1426
        %v1459 = vunpack.c.l.bf16 %v1427
        %v1460 = vunpack.c.l.bf16 %v1428
        %v1461 = vunpack.c.l.bf16 %v1429
        %v1462 = vunpack.c.l.bf16 %v1430
        %v1463 = vunpack.c.l.bf16 %v1431
        %v1464 = vunpack.c.l.bf16 %v1432
        %v1465 = vunpack.c.l.bf16 %v1433
        %v1466 = vunpack.c.l.bf16 %v1434
        %v1467 = vunpack.c.l.bf16 %v1435
        %v1468 = vunpack.c.l.bf16 %v1436
        %v1469 = vunpack.c.l.bf16 %v1437
        %v1470 = vunpack.c.l.bf16 %v1438
        %v1471 = vunpack.c.l.bf16 %v1439
        %v1472 = vunpack.c.l.bf16 %v1440
        %v1473 = vunpack.c.l.bf16 %v1441
        %v1474 = vunpack.c.l.bf16 %v1442
        %v1475 = vunpack.c.l.bf16 %v1443
        %v1476 = vunpack.c.l.bf16 %v1444
        %1477 = vmatprep.subr.mxu0 0.0
        %1478 = vmatpush1.msra.mxu0 %v1445
        %1479 = vmatprep.subr.mxu0 0.0
        %1480 = vmatpush1.msra.mxu0 %v1446
        %1481 = vmatprep.subr.mxu0 0.0
        %1482 = vmatpush1.msra.mxu0 %v1447
        %1483 = vmatprep.subr.mxu0 0.0
        %1484 = vmatpush1.msra.mxu0 %v1448
        %1485 = vmatprep.subr.mxu0 0.0
        %1486 = vmatpush1.msra.mxu0 %v1449
        %1487 = vmatprep.subr.mxu0 0.0
        %1488 = vmatpush1.msra.mxu0 %v1450
        %1489 = vmatprep.subr.mxu0 0.0
        %1490 = vmatpush1.msra.mxu0 %v1451
        %1491 = vmatprep.subr.mxu0 0.0
        %1492 = vmatpush1.msra.mxu0 %v1452
        %1493 = vmatprep.subr.mxu0 0.0
        %1494 = vmatpush1.msra.mxu0 %v1453
        %1495 = vmatprep.subr.mxu0 0.0
        %1496 = vmatpush1.msra.mxu0 %v1454
        %1497 = vmatprep.subr.mxu0 0.0
        %1498 = vmatpush1.msra.mxu0 %v1455
        %1499 = vmatprep.subr.mxu0 0.0
        %1500 = vmatpush1.msra.mxu0 %v1456
        %1501 = vmatprep.subr.mxu0 0.0
        %1502 = vmatpush1.msra.mxu0 %v1457
        %1503 = vmatprep.subr.mxu0 0.0
        %1504 = vmatpush1.msra.mxu0 %v1458
        %1505 = vmatprep.subr.mxu0 0.0
        %1506 = vmatpush1.msra.mxu0 %v1459
        %1507 = vmatprep.subr.mxu0 0.0
        %1508 = vmatpush1.msra.mxu0 %v1460
        %1509 = vmatprep.subr.mxu0 0.0
        %1510 = vmatpush1.msra.mxu0 %v1461
        %1511 = vmatprep.subr.mxu0 0.0
        %1512 = vmatpush1.msra.mxu0 %v1462
        %1513 = vmatprep.subr.mxu0 0.0
        %1514 = vmatpush1.msra.mxu0 %v1463
        %1515 = vmatprep.subr.mxu0 0.0
        %1516 = vmatpush1.msra.mxu0 %v1464
        %1517 = vmatprep.subr.mxu0 0.0
        %1518 = vmatpush1.msra.mxu0 %v1465
        %1519 = vmatprep.subr.mxu0 0.0
        %1520 = vmatpush1.msra.mxu0 %v1466
        %1521 = vmatprep.subr.mxu0 0.0
        %1522 = vmatpush1.msra.mxu0 %v1467
        %1523 = vmatprep.subr.mxu0 0.0
        %1524 = vmatpush1.msra.mxu0 %v1468
        %1525 = vmatprep.subr.mxu0 0.0
        %1526 = vmatpush1.msra.mxu0 %v1469
        %1527 = vmatprep.subr.mxu0 0.0
        %1528 = vmatpush1.msra.mxu0 %v1470
        %1529 = vmatprep.subr.mxu0 0.0
        %1530 = vmatpush1.msra.mxu0 %v1471
        %1531 = vmatprep.subr.mxu0 0.0
        %1532 = vmatpush1.msra.mxu0 %v1472
        %1533 = vmatprep.subr.mxu0 0.0
        %1534 = vmatpush1.msra.mxu0 %v1473
        %1535 = vmatprep.subr.mxu0 0.0
        %1536 = vmatpush1.msra.mxu0 %v1474
        %1537 = vmatprep.subr.mxu0 0.0
        %1538 = vmatpush1.msra.mxu0 %v1475
        %1539 = vmatprep.subr.mxu0 0.0
        %1540 = vmatpush1.msra.mxu0 %v1476
        %1541 = vmatprep.mubr.f32.mxu0 %v324
        %1542 = vmatmul.mubr.f32.gmra.mrb[0].mxu0 %v323
        %v1543 = vpop.f32.mrb[0].mxu0
        %v1544 = vadd.f32 0.0, %v1543
        %v1545 = vpop.f32.mrb[0].mxu0
        %1546 = vdwg.mxu0
        %1547 = vst [vmem:[#allocation2 + $0x40] sm:$0xff] %v1544
        %v1548 = vld [vmem:[%s2] sm:$0x3]
        %v1549 = vld [vmem:[#allocation2] sm:$0xff]
        %v1550 = vld [vmem:[#allocation2 + $0x8] sm:$0xff]
        %v1551 = vld [vmem:[#allocation2 + $0x10] sm:$0xff]
        %v1552 = vld [vmem:[#allocation2 + $0x18] sm:$0xff]
        %v1553 = vld [vmem:[#allocation2 + $0x20] sm:$0xff]
        %v1554 = vld [vmem:[#allocation2 + $0x28] sm:$0xff]
        %v1555 = vld [vmem:[#allocation2 + $0x30] sm:$0xff]
        %v1556 = vld [vmem:[#allocation2 + $0x38] sm:$0xff]
        %v1557 = vld [vmem:[#allocation2 + $0x40] sm:$0xff]
        %v1558 = vld [vmem:[%s4] sm:$0x3]
        %1560 = vset.pattern.permute.xlu0 0
        %1561 = vperm.xlu0 %1560, %v1558
        %v1562 = vpop.permute.xlu0 %1561
        %vm1564 = vcmask 588800
        %v1566 = vsel %vm1564, %v1548, 0
        %1568 = vmatprep.subr.mxu0 0.0
        %1569 = vmatpush1.msra.mxu0 %v1549
        %1570 = vmatprep.subr.mxu0 0.0
        %1571 = vmatpush1.msra.mxu0 %v1550
        %1572 = vmatprep.subr.mxu0 0.0
        %1573 = vmatpush1.msra.mxu0 %v1551
        %1574 = vmatprep.subr.mxu0 0.0
        %1575 = vmatpush1.msra.mxu0 %v1552
        %1576 = vmatprep.subr.mxu0 0.0
        %1577 = vmatpush1.msra.mxu0 %v1553
        %1578 = vmatprep.subr.mxu0 0.0
        %1579 = vmatpush1.msra.mxu0 %v1554
        %1580 = vmatprep.subr.mxu0 0.0
        %1581 = vmatpush1.msra.mxu0 %v1555
        %1582 = vmatprep.subr.mxu0 0.0
        %1583 = vmatpush1.msra.mxu0 %v1556
        %1584 = vmatprep.subr.mxu0 0.0
        %1585 = vmatpush1.msra.mxu0 %v1557
        %1586 = vmatprep.subr.mxu0 0.0
        %1587 = vmatpush1.msra.mxu0 0.0
        %1588 = vmatprep.subr.mxu0 0.0
        %1589 = vmatpush1.msra.mxu0 0.0
        %1590 = vmatprep.subr.mxu0 0.0
        %1591 = vmatpush1.msra.mxu0 0.0
        %1592 = vmatprep.subr.mxu0 0.0
        %1593 = vmatpush1.msra.mxu0 0.0
        %1594 = vmatprep.subr.mxu0 0.0
        %1595 = vmatpush1.msra.mxu0 0.0
        %1596 = vmatprep.subr.mxu0 0.0
        %1597 = vmatpush1.msra.mxu0 0.0
        %1598 = vmatprep.subr.mxu0 0.0
        %1599 = vmatpush1.msra.mxu0 0.0
        %1600 = vmatprep.subr.mxu0 0.0
        %1601 = vmatpush1.msra.mxu0 0.0
        %1602 = vmatprep.subr.mxu0 0.0
        %1603 = vmatpush1.msra.mxu0 0.0
        %1604 = vmatprep.subr.mxu0 0.0
        %1605 = vmatpush1.msra.mxu0 0.0
        %1606 = vmatprep.subr.mxu0 0.0
        %1607 = vmatpush1.msra.mxu0 0.0
        %1608 = vmatprep.subr.mxu0 0.0
        %1609 = vmatpush1.msra.mxu0 0.0
        %1610 = vmatprep.subr.mxu0 0.0
        %1611 = vmatpush1.msra.mxu0 0.0
        %1612 = vmatprep.subr.mxu0 0.0
        %1613 = vmatpush1.msra.mxu0 0.0
        %1614 = vmatprep.subr.mxu0 0.0
        %1615 = vmatpush1.msra.mxu0 0.0
        %1616 = vmatprep.subr.mxu0 0.0
        %1617 = vmatpush1.msra.mxu0 0.0
        %1618 = vmatprep.subr.mxu0 0.0
        %1619 = vmatpush1.msra.mxu0 0.0
        %1620 = vmatprep.subr.mxu0 0.0
        %1621 = vmatpush1.msra.mxu0 0.0
        %1622 = vmatprep.subr.mxu0 0.0
        %1623 = vmatpush1.msra.mxu0 0.0
        %1624 = vmatprep.subr.mxu0 0.0
        %1625 = vmatpush1.msra.mxu0 0.0
        %1626 = vmatprep.subr.mxu0 0.0
        %1627 = vmatpush1.msra.mxu0 0.0
        %1628 = vmatprep.subr.mxu0 0.0
        %1629 = vmatpush1.msra.mxu0 0.0
        %1630 = vmatprep.subr.mxu0 0.0
        %1631 = vmatpush1.msra.mxu0 0.0
        %1632 = vmatprep.mubr.f32.mxu0 0.0
        %1633 = vmatmul.mubr.f32.gmra.mrb[0].mxu0 %v1566
        %v1634 = vpop.f32.mrb[0].mxu0
        %v1635 = vadd.f32 %v1562, %v1634
        %v1636 = vpop.f32.mrb[0].mxu0
        %1637 = vdwg.mxu0
        %v1638 = vld [vmem:[%s3] sm:$0xff]
        %v1639 = vld [vmem:[%s3 + $0x8] sm:$0xff]
        %v1640 = vld [vmem:[%s3 + $0x10] sm:$0xff]
        %v1641 = vld [vmem:[%s3 + $0x18] sm:$0xff]
        %v1642 = vld [vmem:[%s3 + $0x20] sm:$0xff]
        %v1643 = vld [vmem:[%s3 + $0x28] sm:$0xff]
        %v1644 = vld [vmem:[%s3 + $0x30] sm:$0xff]
        %v1645 = vld [vmem:[%s3 + $0x38] sm:$0xff]
        %v1646 = vld [vmem:[%s3 + $0x40] sm:$0xff]
        %v1647 = vld [vmem:[%s3 + $0x48] sm:$0xff]
        %v1648 = vld [vmem:[%s3 + $0x50] sm:$0xff]
        %v1649 = vld [vmem:[%s3 + $0x58] sm:$0xff]
        %v1650 = vld [vmem:[%s3 + $0x60] sm:$0xff]
        %v1651 = vld [vmem:[%s3 + $0x68] sm:$0xff]
        %v1652 = vld [vmem:[%s3 + $0x70] sm:$0xff]
        %v1653 = vld [vmem:[%s3 + $0x78] sm:$0xff]
        %v1654 = vunpack.c.l.bf16 %v1638
        %v1655 = vunpack.c.h.bf16 %v1638
        %v1656 = vunpack.c.l.bf16 %v1639
        %v1657 = vunpack.c.h.bf16 %v1639
        %v1658 = vunpack.c.l.bf16 %v1640
        %v1659 = vunpack.c.h.bf16 %v1640
        %v1660 = vunpack.c.l.bf16 %v1641
        %v1661 = vunpack.c.h.bf16 %v1641
        %v1662 = vunpack.c.l.bf16 %v1642
        %v1663 = vunpack.c.h.bf16 %v1642
        %v1664 = vunpack.c.l.bf16 %v1643
        %v1665 = vunpack.c.h.bf16 %v1643
        %v1666 = vunpack.c.l.bf16 %v1644
        %v1667 = vunpack.c.h.bf16 %v1644
        %v1668 = vunpack.c.l.bf16 %v1645
        %v1669 = vunpack.c.h.bf16 %v1645
        %v1670 = vunpack.c.l.bf16 %v1646
        %v1671 = vunpack.c.h.bf16 %v1646
        %v1672 = vunpack.c.l.bf16 %v1647
        %v1673 = vunpack.c.h.bf16 %v1647
        %v1674 = vunpack.c.l.bf16 %v1648
        %v1675 = vunpack.c.h.bf16 %v1648
        %v1676 = vunpack.c.l.bf16 %v1649
        %v1677 = vunpack.c.h.bf16 %v1649
        %v1678 = vunpack.c.l.bf16 %v1650
        %v1679 = vunpack.c.h.bf16 %v1650
        %v1680 = vunpack.c.l.bf16 %v1651
        %v1681 = vunpack.c.h.bf16 %v1651
        %v1682 = vunpack.c.l.bf16 %v1652
        %v1683 = vunpack.c.h.bf16 %v1652
        %v1684 = vunpack.c.l.bf16 %v1653
        %v1685 = vunpack.c.h.bf16 %v1653
        %1686 = vmatprep.subr.mxu0 %v1655
        %1687 = vmatpush1.msra.mxu0 %v1654
        %1688 = vmatprep.subr.mxu0 %v1657
        %1689 = vmatpush1.msra.mxu0 %v1656
        %1690 = vmatprep.subr.mxu0 %v1659
        %1691 = vmatpush1.msra.mxu0 %v1658
        %1692 = vmatprep.subr.mxu0 %v1661
        %1693 = vmatpush1.msra.mxu0 %v1660
        %1694 = vmatprep.subr.mxu0 %v1663
        %1695 = vmatpush1.msra.mxu0 %v1662
        %1696 = vmatprep.subr.mxu0 %v1665
        %1697 = vmatpush1.msra.mxu0 %v1664
        %1698 = vmatprep.subr.mxu0 %v1667
        %1699 = vmatpush1.msra.mxu0 %v1666
        %1700 = vmatprep.subr.mxu0 %v1669
        %1701 = vmatpush1.msra.mxu0 %v1668
        %1702 = vmatprep.subr.mxu0 %v1671
        %1703 = vmatpush1.msra.mxu0 %v1670
        %1704 = vmatprep.subr.mxu0 %v1673
        %1705 = vmatpush1.msra.mxu0 %v1672
        %1706 = vmatprep.subr.mxu0 %v1675
        %1707 = vmatpush1.msra.mxu0 %v1674
        %1708 = vmatprep.subr.mxu0 %v1677
        %1709 = vmatpush1.msra.mxu0 %v1676
        %1710 = vmatprep.subr.mxu0 %v1679
        %1711 = vmatpush1.msra.mxu0 %v1678
        %1712 = vmatprep.subr.mxu0 %v1681
        %1713 = vmatpush1.msra.mxu0 %v1680
        %1714 = vmatprep.subr.mxu0 %v1683
        %1715 = vmatpush1.msra.mxu0 %v1682
        %1716 = vmatprep.subr.mxu0 %v1685
        %1717 = vmatpush1.msra.mxu0 %v1684
        %1718 = vmatprep.subr.mxu0 0.0
        %1719 = vmatpush1.msra.mxu0 0.0
        %1720 = vmatprep.subr.mxu0 0.0
        %1721 = vmatpush1.msra.mxu0 0.0
        %1722 = vmatprep.subr.mxu0 0.0
        %1723 = vmatpush1.msra.mxu0 0.0
        %1724 = vmatprep.subr.mxu0 0.0
        %1725 = vmatpush1.msra.mxu0 0.0
        %1726 = vmatprep.subr.mxu0 0.0
        %1727 = vmatpush1.msra.mxu0 0.0
        %1728 = vmatprep.subr.mxu0 0.0
        %1729 = vmatpush1.msra.mxu0 0.0
        %1730 = vmatprep.subr.mxu0 0.0
        %1731 = vmatpush1.msra.mxu0 0.0
        %1732 = vmatprep.subr.mxu0 0.0
        %1733 = vmatpush1.msra.mxu0 0.0
        %1734 = vmatprep.subr.mxu0 0.0
        %1735 = vmatpush1.msra.mxu0 0.0
        %1736 = vmatprep.subr.mxu0 0.0
        %1737 = vmatpush1.msra.mxu0 0.0
        %1738 = vmatprep.subr.mxu0 0.0
        %1739 = vmatpush1.msra.mxu0 0.0
        %1740 = vmatprep.subr.mxu0 0.0
        %1741 = vmatpush1.msra.mxu0 0.0
        %1742 = vmatprep.subr.mxu0 0.0
        %1743 = vmatpush1.msra.mxu0 0.0
        %1744 = vmatprep.subr.mxu0 0.0
        %1745 = vmatpush1.msra.mxu0 0.0
        %1746 = vmatprep.subr.mxu0 0.0
        %1747 = vmatpush1.msra.mxu0 0.0
        %1748 = vmatprep.subr.mxu0 0.0
        %1749 = vmatpush1.msra.mxu0 0.0
        %1750 = vmatprep.mubr.f32.mxu0 0.0
        %1751 = vmatmul.mubr.f32.gmra.mrb[0].mxu0 %v1635
        %v1752 = vpop.f32.mrb[0].mxu0
        %v1753 = vadd.f32 0.0, %v1752
        %v1754 = vpop.f32.mrb[0].mxu0
        %v1755 = vadd.f32 0.0, %v1754
        %1756 = vdwg.mxu0
        %v1757 = vmax.f32 %v1753, 0.0
        %v1758 = vmax.f32 %v1755, 0.0
        %v1759 = vld [vmem:[%s5] sm:$0x1]
        %v1760 = vld [vmem:[#allocation3] sm:$0x1]
        %1762 = vset.pattern.permute.xlu0 0
        %1763 = vperm.xlu0 %1762, %v1760
        %v1764 = vpop.permute.xlu0 %1763
        %v1766 = vlaneseq
        %v1767 = vshrl.u32 %v1766, 7
        %v1768 = vsub.s32 0, %v1767
        %v1769 = vrot.slane %v1764, %v1768
        %vm1770 = vcmask 15360
        %v1772 = vsel %vm1770, %v1759, 0
        %vm1774 = vcmask 1041408
        %v1776 = vsel %vm1774, %v1757, 0
        %v1779 = vsel %vm1774, %v1758, 0
        %1781 = vmatprep.subr.mxu0 %v1779
        %1782 = vmatpush1.msra.mxu0 %v1776
        %1783 = vmatprep.subr.mxu0 0.0
        %1784 = vmatpush1.msra.mxu0 0.0
        %1785 = vmatprep.subr.mxu0 0.0
        %1786 = vmatpush1.msra.mxu0 0.0
        %1787 = vmatprep.subr.mxu0 0.0
        %1788 = vmatpush1.msra.mxu0 0.0
        %1789 = vmatprep.subr.mxu0 0.0
        %1790 = vmatpush1.msra.mxu0 0.0
        %1791 = vmatprep.subr.mxu0 0.0
        %1792 = vmatpush1.msra.mxu0 0.0
        %1793 = vmatprep.subr.mxu0 0.0
        %1794 = vmatpush1.msra.mxu0 0.0
        %1795 = vmatprep.subr.mxu0 0.0
        %1796 = vmatpush1.msra.mxu0 0.0
        %1797 = vmatprep.subr.mxu0 0.0
        %1798 = vmatpush1.msra.mxu0 0.0
        %1799 = vmatprep.subr.mxu0 0.0
        %1800 = vmatpush1.msra.mxu0 0.0
        %1801 = vmatprep.subr.mxu0 0.0
        %1802 = vmatpush1.msra.mxu0 0.0
        %1803 = vmatprep.subr.mxu0 0.0
        %1804 = vmatpush1.msra.mxu0 0.0
        %1805 = vmatprep.subr.mxu0 0.0
        %1806 = vmatpush1.msra.mxu0 0.0
        %1807 = vmatprep.subr.mxu0 0.0
        %1808 = vmatpush1.msra.mxu0 0.0
        %1809 = vmatprep.subr.mxu0 0.0
        %1810 = vmatpush1.msra.mxu0 0.0
        %1811 = vmatprep.subr.mxu0 0.0
        %1812 = vmatpush1.msra.mxu0 0.0
        %1813 = vmatprep.subr.mxu0 0.0
        %1814 = vmatpush1.msra.mxu0 0.0
        %1815 = vmatprep.subr.mxu0 0.0
        %1816 = vmatpush1.msra.mxu0 0.0
        %1817 = vmatprep.subr.mxu0 0.0
        %1818 = vmatpush1.msra.mxu0 0.0
        %1819 = vmatprep.subr.mxu0 0.0
        %1820 = vmatpush1.msra.mxu0 0.0
        %1821 = vmatprep.subr.mxu0 0.0
        %1822 = vmatpush1.msra.mxu0 0.0
        %1823 = vmatprep.subr.mxu0 0.0
        %1824 = vmatpush1.msra.mxu0 0.0
        %1825 = vmatprep.subr.mxu0 0.0
        %1826 = vmatpush1.msra.mxu0 0.0
        %1827 = vmatprep.subr.mxu0 0.0
        %1828 = vmatpush1.msra.mxu0 0.0
        %1829 = vmatprep.subr.mxu0 0.0
        %1830 = vmatpush1.msra.mxu0 0.0
        %1831 = vmatprep.subr.mxu0 0.0
        %1832 = vmatpush1.msra.mxu0 0.0
        %1833 = vmatprep.subr.mxu0 0.0
        %1834 = vmatpush1.msra.mxu0 0.0
        %1835 = vmatprep.subr.mxu0 0.0
        %1836 = vmatpush1.msra.mxu0 0.0
        %1837 = vmatprep.subr.mxu0 0.0
        %1838 = vmatpush1.msra.mxu0 0.0
        %1839 = vmatprep.subr.mxu0 0.0
        %1840 = vmatpush1.msra.mxu0 0.0
        %1841 = vmatprep.subr.mxu0 0.0
        %1842 = vmatpush1.msra.mxu0 0.0
        %1843 = vmatprep.subr.mxu0 0.0
        %1844 = vmatpush1.msra.mxu0 0.0
        %1845 = vmatprep.mubr.f32.mxu0 0.0
        %1846 = vmatmul.mubr.f32.gmra.mrb[0].mxu0 %v1772
        %v1847 = vpop.f32.mrb[0].mxu0
        %v1848 = vadd.f32 %v1769, %v1847
        %v1849 = vpop.f32.mrb[0].mxu0
        %v1850 = vadd.f32 %v1769, %v1849
        %1851 = vdwg.mxu0
        %v1852 = vxor.u32 %v1848, 2147483648
        %v1853 = vxor.u32 %v1850, 2147483648
        %v1854 = vmul.f32 %v1852, 1.442695
        %v1855 = vpow.pop %v1854
        %v1856 = vmul.f32 %v1853, 1.442695
        %v1857 = vpow.pop %v1856
        %v1858 = vadd.f32 %v1855, 1.0
        %v1859 = vadd.f32 %v1857, 1.0
        %v1860 = vrcp.pop %v1858
        %v1861 = vmul.f32 1.0, %v1860
        %v1862 = vrcp.pop %v1859
        %v1863 = vmul.f32 1.0, %v1862
        %v1864 = vld [vmem:[%s7] sm:$0xff]
        %vm1865 = vcmask 7168
        %v1867 = vsel %vm1865, %v1864, 0
        %vm1869 = vcmask 1040384
        %v1871 = vsel %vm1869, %v1861, 0
        %v1874 = vsel %vm1869, %v1863, 0
        %1876 = vmatprep.subr.mxu0 %v1874
        %1877 = vmatpush1.msra.mxu0 %v1871
        %1878 = vmatprep.subr.mxu0 0.0
        %1879 = vmatpush1.msra.mxu0 0.0
        %1880 = vmatprep.subr.mxu0 0.0
        %1881 = vmatpush1.msra.mxu0 0.0
        %1882 = vmatprep.subr.mxu0 0.0
        %1883 = vmatpush1.msra.mxu0 0.0
        %1884 = vmatprep.subr.mxu0 0.0
        %1885 = vmatpush1.msra.mxu0 0.0
        %1886 = vmatprep.subr.mxu0 0.0
        %1887 = vmatpush1.msra.mxu0 0.0
        %1888 = vmatprep.subr.mxu0 0.0
        %1889 = vmatpush1.msra.mxu0 0.0
        %1890 = vmatprep.subr.mxu0 0.0
        %1891 = vmatpush1.msra.mxu0 0.0
        %1892 = vmatprep.subr.mxu0 0.0
        %1893 = vmatpush1.msra.mxu0 0.0
        %1894 = vmatprep.subr.mxu0 0.0
        %1895 = vmatpush1.msra.mxu0 0.0
        %1896 = vmatprep.subr.mxu0 0.0
        %1897 = vmatpush1.msra.mxu0 0.0
        %1898 = vmatprep.subr.mxu0 0.0
        %1899 = vmatpush1.msra.mxu0 0.0
        %1900 = vmatprep.subr.mxu0 0.0
        %1901 = vmatpush1.msra.mxu0 0.0
        %1902 = vmatprep.subr.mxu0 0.0
        %1903 = vmatpush1.msra.mxu0 0.0
        %1904 = vmatprep.subr.mxu0 0.0
        %1905 = vmatpush1.msra.mxu0 0.0
        %1906 = vmatprep.subr.mxu0 0.0
        %1907 = vmatpush1.msra.mxu0 0.0
        %1908 = vmatprep.subr.mxu0 0.0
        %1909 = vmatpush1.msra.mxu0 0.0
        %1910 = vmatprep.subr.mxu0 0.0
        %1911 = vmatpush1.msra.mxu0 0.0
        %1912 = vmatprep.subr.mxu0 0.0
        %1913 = vmatpush1.msra.mxu0 0.0
        %1914 = vmatprep.subr.mxu0 0.0
        %1915 = vmatpush1.msra.mxu0 0.0
        %1916 = vmatprep.subr.mxu0 0.0
        %1917 = vmatpush1.msra.mxu0 0.0
        %1918 = vmatprep.subr.mxu0 0.0
        %1919 = vmatpush1.msra.mxu0 0.0
        %1920 = vmatprep.subr.mxu0 0.0
        %1921 = vmatpush1.msra.mxu0 0.0
        %1922 = vmatprep.subr.mxu0 0.0
        %1923 = vmatpush1.msra.mxu0 0.0
        %1924 = vmatprep.subr.mxu0 0.0
        %1925 = vmatpush1.msra.mxu0 0.0
        %1926 = vmatprep.subr.mxu0 0.0
        %1927 = vmatpush1.msra.mxu0 0.0
        %1928 = vmatprep.subr.mxu0 0.0
        %1929 = vmatpush1.msra.mxu0 0.0
        %1930 = vmatprep.subr.mxu0 0.0
        %1931 = vmatpush1.msra.mxu0 0.0
        %1932 = vmatprep.subr.mxu0 0.0
        %1933 = vmatpush1.msra.mxu0 0.0
        %1934 = vmatprep.subr.mxu0 0.0
        %1935 = vmatpush1.msra.mxu0 0.0
        %1936 = vmatprep.subr.mxu0 0.0
        %1937 = vmatpush1.msra.mxu0 0.0
        %1938 = vmatprep.subr.mxu0 0.0
        %1939 = vmatpush1.msra.mxu0 0.0
        %1940 = vmatprep.mubr.f32.mxu0 0.0
        %1941 = vmatmul.mubr.f32.gmra.mrb[0].mxu0 %v1867
        %v1942 = vpop.f32.mrb[0].mxu0
        %v1943 = vadd.f32 0.0, %v1942
        %v1944 = vpop.f32.mrb[0].mxu0
        %v1945 = vadd.f32 0.0, %v1944
        %1946 = vdwg.mxu0
        %v1947 = vmul.f32 %v323, %v1943
        %v1948 = vmul.f32 %v324, %v1945
        %1949 = vst [vmem:[%s322] sm:$0xff] %v1947
        %1950 = vst [vmem:[%s322 + $0x8] sm:$0xff] %v1948
        %p1951 = scmp.lt.s32.totalorder %s22, 1
        %s1952 = scalar_select %p1951, %s22, 1
        %s1953 = smul.addr %s1952, 2
        %s1954 = smul.addr %s1953, 8
        %s1955 = scalar_lea.vmem %s8, %s1954
        // Predicated region
        $region57: #{polar_transform_attention.1} parent=51 // pred_check
          %p1956 = pneg %p213
        $region58: #{polar_transform_attention.1} parent=51 // pred_check_branch
          %1958 = sbr.rel (%p1956) target = $region60
        $region59: #{polar_transform_attention.1} parent=51 // pred_region
          _
        $region60: #{polar_transform_attention.1} parent=51 // pred_fallthru
          _
      $region52: #{polar_transform_attention.1} parent=5 // pred_fallthru
        _
      %p1959 = scmp.le.s32.totalorder 2, %s17
      // Predicated region
      $region61: #{polar_transform_attention.1} parent=5 // pred_check
        %p1960 = pneg %p1959
      $region62: #{polar_transform_attention.1} parent=5 // pred_check_branch
        %1962 = sbr.rel (%p1960) target = $region64
      $region63: #{polar_transform_attention.1} parent=5 // pred_region
        %s1963 = ssub.s32 %s17, 2
        // Predicated region
        $region65: #{polar_transform_attention.1} parent=63 // pred_check
          %p1964 = pneg %p219
        $region66: #{polar_transform_attention.1} parent=63 // pred_check_branch
          %1966 = sbr.rel (%p1964) target = $region68
        $region67: #{polar_transform_attention.1} parent=63 // pred_region
          %p1967 = scmp.lt.s32.totalorder %s23, 1
          %s1968 = scalar_select %p1967, %s23, 1
          %s1969 = smul.addr %s1968, 2
          %s1970 = smul.addr %s1969, 8
          %s1971 = scalar_lea.vmem %s8, %s1970
        $region68: #{polar_transform_attention.1} parent=63 // pred_fallthru
          _
      $region64: #{polar_transform_attention.1} parent=5 // pred_fallthru
        _
    $region6: #{polar_transform_attention.1} parent=1 // loop_footer
      %s21 = sadd.s32 1, %s17
    $region7: #{polar_transform_attention.1} parent=1 // loop_footer_branch
      %16 = sbr.rel target = $region3
    $region8: #{polar_transform_attention.1} parent=1 // loop_exit
      _
    %1972 = vsyncpa [#allocation5], 1
    %s1973 = scalar_lea.sflag [#allocation5], 1
    %1974 = vsyncpa %s1973, 1

</llo_original>
